<compile_context>
chip_gen: v7x
topology: tpu7x:2x2x1
jax: 0.10.0
libtpu: 0.0.40
codegen_flags: <defaults>
</compile_context>

<pallas_src>
import jax
import jax.numpy as jnp
from jax.experimental import pallas as pl
from jax.experimental.pallas import tpu as pltpu

K1 = 9          # first conv kernel size
PAD = 4         # first conv padding (second conv: kernel 1, padding 0)
HALO_BLK = 8    # halo rows fetched per neighbour block (one sublane tile)


def _ffn_kernel(x_ref, lh_ref, rh_ref, w1_ref, b1_ref, w2_ref, b2_ref, o_ref):
    # x_ref : (tT, d_in)       current time tile (input dtype, e.g. f32)
    # lh_ref: (8, d_in)        rows [t0-8, t0)        (only the last 4 are used)
    # rh_ref: (8, d_in)        rows [t0+tT, t0+tT+8)  (only the first 4 are used)
    # w1_ref: (K1*d_in, d_hid) conv1 weights, tap-major flattened (bf16)
    # b1_ref: (1, d_hid) f32 ; w2_ref: (d_hid, d_in) bf16 ; b2_ref: (1, d_in) f32
    # o_ref : (tT, d_in)
    i = pl.program_id(1)
    n_t = pl.num_programs(1)
    tT, d_in = x_ref.shape

    x_tile = x_ref[...]                          # residual (original precision)
    xc = x_tile.astype(jnp.bfloat16)

    # 8-row halo blocks, selected to zero on the boundary tiles (== the conv's
    # zero padding).  jnp.where (select), not a multiply mask, so stray Inf/NaN
    # in the fetched rows cannot leak into boundary outputs.
    left = jnp.where(i > 0, lh_ref[...], 0.0).astype(jnp.bfloat16)
    right = jnp.where(i < n_t - 1, rh_ref[...], 0.0).astype(jnp.bfloat16)

    # Virtually padded window from three 8-row-aligned pieces.
    # xw row r corresponds to global time row (t0 - 8 + r).
    xw = jnp.concatenate([left, xc, right], axis=0)       # (tT + 16, d_in) bf16

    if d_in <= 128 or d_in % 128 == 0:
        # Fold the 9 taps into one deep-K MXU matmul:
        # (tT, 9*d_in) @ (9*d_in, d_hid), f32 accumulation inside the MXU.
        xcat = jnp.concatenate(
            [xw[4 + k:4 + k + tT, :] for k in range(K1)], axis=1)
        acc = jnp.dot(xcat, w1_ref[...], preferred_element_type=jnp.float32)
    else:
        # Lane-misaligned large d_in: 9 shifted matmuls, acc init from tap 0.
        acc = jnp.dot(xw[4:4 + tT, :], w1_ref[0:d_in, :],
                      preferred_element_type=jnp.float32)
        for k in range(1, K1):
            acc = acc + jnp.dot(xw[4 + k:4 + k + tT, :],
                                w1_ref[k * d_in:(k + 1) * d_in, :],
                                preferred_element_type=jnp.float32)

    h = jnp.maximum(acc + b1_ref[...], 0.0)                # ReLU, f32
    y = jnp.dot(h.astype(w2_ref.dtype), w2_ref[...],       # Conv1d k=1 (bf16 MXU)
                preferred_element_type=jnp.float32) + b2_ref[...]
    # TODO(synk): Dropout is identity here (inference / eval mode).
    o_ref[...] = (y + x_tile.astype(jnp.float32)).astype(o_ref.dtype)


def _round_up(n, m):
    return -(-n // m) * m


def _vmem_capacity_bytes():
    try:
        return int(pltpu.get_tpu_info().vmem_capacity_bytes)
    except Exception:
        return 64 * 1024 * 1024          # conservative (v7x per-TensorCore)


def _estimate_vmem_bytes(tT, d_in, d_hid, x_bytes, weight_buffers):
    """Rough per-step working-set estimate (pipelined I/O + weights + scratch)."""
    f32, bf16 = 4, 2
    io = 2 * (tT * d_in * x_bytes                       # input tile
              + tT * d_in * x_bytes                     # output tile
              + 2 * HALO_BLK * d_in * x_bytes)          # two halo blocks
    w = weight_buffers * ((K1 * d_in + d_in) * d_hid * bf16
                          + 8 * (d_hid + d_in) * f32)
    scratch = (tT + 2 * HALO_BLK) * d_in * (bf16 + x_bytes)   # xw + x_tile
    scratch += tT * K1 * d_in * bf16                          # xcat
    scratch += 2 * tT * d_hid * f32 + tT * d_hid * bf16       # acc, relu, h bf16
    scratch += 2 * tT * d_in * f32                            # y, out f32
    return io + w + scratch


def positionwise_ffn(x, w1, b1, w2, b2, *, tile_t=512):
    """x: (B, T, d_in); w1: (K1, d_in, d_hid); b1: (d_hid,);
       w2: (d_hid, d_in); b2: (d_in,)  ->  (B, T, d_in).  Arbitrary T."""
    B, T, d_in = x.shape
    k1, d_in2, d_hid = w1.shape
    assert k1 == K1 and d_in2 == d_in
    assert w2.shape == (d_hid, d_in)
    assert b1.shape == (d_hid,) and b2.shape == (d_in,)

    x_bytes = jnp.dtype(x.dtype).itemsize
    cap = _vmem_capacity_bytes()
    budget = int(cap * 0.75)

    # Time tile: multiple of 8, shrunk until the working set fits the budget.
    tT = max(HALO_BLK,
             (min(tile_t, _round_up(T, HALO_BLK)) // HALO_BLK) * HALO_BLK)
    while tT > 64 and _estimate_vmem_bytes(tT, d_in, d_hid, x_bytes, 1) > budget:
        tT = max(64, ((tT // 2) // HALO_BLK) * HALO_BLK)

    T_pad = _round_up(T, tT)
    n_t = T_pad // tT
    # Keep the grid even for the v7x 2-TensorCore split when it is cheap.
    if (B * n_t) % 2 == 1 and tT >= 128 and tT % (2 * HALO_BLK) == 0:
        tT //= 2
        T_pad = _round_up(T, tT)
        n_t = T_pad // tT

    nTB = tT // HALO_BLK
    n_hb = T_pad // HALO_BLK

    # Pad T up to a tile multiple with zeros (tail rows sliced off below).
    xp = x if T_pad == T else jnp.pad(x, ((0, 0), (0, T_pad - T), (0, 0)))

    # bf16 weights for the MXU; f32 biases (accumulation stays f32 in-kernel).
    w1f = w1.reshape(K1 * d_in, d_hid).astype(jnp.bfloat16)
    w2b = w2.astype(jnp.bfloat16)
    b1_2d = b1.reshape(1, d_hid).astype(jnp.float32)
    b2_2d = b2.reshape(1, d_in).astype(jnp.float32)

    vmem_limit = min(
        int(cap * 0.85),
        max(32 * 1024 * 1024,
            int(1.5 * _estimate_vmem_bytes(tT, d_in, d_hid, x_bytes, 2))))

    def run(single_buffer_weights):
        wkw = ({"pipeline_mode": pl.Buffered(1)}
               if single_buffer_weights else {})
        x_spec = pl.BlockSpec((None, tT, d_in), lambda b, i: (b, i, 0))
        lh_spec = pl.BlockSpec(
            (None, HALO_BLK, d_in),
            lambda b, i: (b, jnp.maximum(i * nTB - 1, 0), 0))
        rh_spec = pl.BlockSpec(
            (None, HALO_BLK, d_in),
            lambda b, i: (b, jnp.minimum((i + 1) * nTB, n_hb - 1), 0))
        # Weights / biases: constant index_maps -> VMEM-resident across grid.
        w1_spec = pl.BlockSpec((K1 * d_in, d_hid), lambda b, i: (0, 0), **wkw)
        b1_spec = pl.BlockSpec((1, d_hid), lambda b, i: (0, 0), **wkw)
        w2_spec = pl.BlockSpec((d_hid, d_in), lambda b, i: (0, 0), **wkw)
        b2_spec = pl.BlockSpec((1, d_in), lambda b, i: (0, 0), **wkw)
        out_spec = pl.BlockSpec((None, tT, d_in), lambda b, i: (b, i, 0))

        return pl.pallas_call(
            _ffn_kernel,
            out_shape=jax.ShapeDtypeStruct((B, T_pad, d_in), x.dtype),
            grid_spec=pltpu.PrefetchScalarGridSpec(
                num_scalar_prefetch=0,
                grid=(B, n_t),
                in_specs=[x_spec, lh_spec, rh_spec,
                          w1_spec, b1_spec, w2_spec, b2_spec],
                out_specs=out_spec,
            ),
            compiler_params=pltpu.CompilerParams(
                dimension_semantics=("parallel", "parallel"),
                vmem_limit_bytes=vmem_limit),
        )(xp, xp, xp, w1f, b1_2d, w2b, b2_2d)

    try:
        out = run(True)
    except Exception:
        # Runtime rejected single-buffered specs -> default double-buffering.
        out = run(False)

    return out if T_pad == T else out[:, :T, :]


def positionwise_ffn_ref(x, w1, b1, w2, b2):
    """Plain-JAX reference mirroring the PyTorch forward (eval mode), using the
       same bf16-matmul / f32-accumulate / f32-residual numerics as the kernel."""
    B, T, d_in = x.shape
    xf = x.astype(jnp.float32)
    xb = xf.astype(jnp.bfloat16).astype(jnp.float32)     # conv-input rounding
    w1b = w1.astype(jnp.bfloat16).astype(jnp.float32)
    w2b = w2.astype(jnp.bfloat16).astype(jnp.float32)
    x_pad = jnp.pad(xb, ((0, 0), (PAD, PAD), (0, 0)))
    acc = jnp.zeros((B, T, w1.shape[2]), jnp.float32)
    for k in range(K1):
        acc = acc + jnp.einsum('btc,ch->bth', x_pad[:, k:k + T, :], w1b[k])
    h = jnp.maximum(acc + b1.astype(jnp.float32), 0.0)
    hb = h.astype(jnp.bfloat16).astype(jnp.float32)
    y = jnp.einsum('bth,hc->btc', hb, w2b) + b2.astype(jnp.float32)
    return (y + xf).astype(x.dtype)


if __name__ == "__main__":
    key = jax.random.PRNGKey(0)
    kx, kw1, kb1, kw2, kb2, kx2 = jax.random.split(key, 6)

    # Small config; tile_t=16 forces several time tiles so the halo fetch and
    # boundary zero-masking paths are exercised.
    B, T, d_in, d_hid = 2, 64, 32, 64
    x = jax.random.normal(kx, (B, T, d_in), jnp.float32)
    # nn.Conv1d weights stored pre-transposed for the (T, C) @ (C, H) form:
    # w1[k] == torch_conv1.weight[:, :, k].T ; w2 == torch_conv2.weight[:, :, 0].T
    w1 = jax.random.normal(kw1, (K1, d_in, d_hid), jnp.float32) * 0.05
    b1 = jax.random.normal(kb1, (d_hid,), jnp.float32) * 0.05
    w2 = jax.random.normal(kw2, (d_hid, d_in), jnp.float32) * 0.05
    b2 = jax.random.normal(kb2, (d_in,), jnp.float32) * 0.05

    out = positionwise_ffn(x, w1, b1, w2, b2, tile_t=16)
    jax.block_until_ready(out)
    ref = positionwise_ffn_ref(x, w1, b1, w2, b2)
    assert out.shape == (B, T, d_in)
    assert jnp.allclose(out, ref, atol=2e-3, rtol=2e-3), \
        float(jnp.max(jnp.abs(out - ref)))

    # Awkward length (not a multiple of 8) exercises the T-padding path.
    T2 = 70
    x2 = jax.random.normal(kx2, (B, T2, d_in), jnp.float32)
    out2 = positionwise_ffn(x2, w1, b1, w2, b2)
    jax.block_until_ready(out2)
    ref2 = positionwise_ffn_ref(x2, w1, b1, w2, b2)
    assert out2.shape == (B, T2, d_in)
    assert jnp.allclose(out2, ref2, atol=2e-3, rtol=2e-3), \
        float(jnp.max(jnp.abs(out2 - ref2)))

    print("KERNEL_OK")
</pallas_src>

<mosaic_0001>
module attributes {stable_mosaic.version = 11 : i64} {
  func.func @_ffn_kernel(%arg0: i32, %arg1: i32, %arg2: memref<1x16x32xf32, #tpu.memory_space<vmem>>, %arg3: memref<1x8x32xf32, #tpu.memory_space<vmem>>, %arg4: memref<1x8x32xf32, #tpu.memory_space<vmem>>, %arg5: memref<288x64xbf16, #tpu.memory_space<vmem>>, %arg6: memref<1x64xf32, #tpu.memory_space<vmem>>, %arg7: memref<64x32xbf16, #tpu.memory_space<vmem>>, %arg8: memref<1x32xf32, #tpu.memory_space<vmem>>, %arg9: memref<1x16x32xf32, #tpu.memory_space<vmem>>) attributes {dimension_semantics = [#tpu.dimension_semantics<parallel>, #tpu.dimension_semantics<parallel>], iteration_bounds = array<i64: 2, 4>, scalar_prefetch = 0 : i64, scratch_operands = 0 : i64, tpu.core_type = #tpu.core_type<tc>, window_params = [{transform_indices = @transform_0, window_bounds = array<i64: 1, 16, 32>}, {transform_indices = @transform_1, window_bounds = array<i64: 1, 8, 32>}, {transform_indices = @transform_2, window_bounds = array<i64: 1, 8, 32>}, {pipeline_mode = #tpu.pipeline_mode<synchronous>, transform_indices = @transform_3, window_bounds = array<i64: 288, 64>}, {pipeline_mode = #tpu.pipeline_mode<synchronous>, transform_indices = @transform_4, window_bounds = array<i64: 1, 64>}, {pipeline_mode = #tpu.pipeline_mode<synchronous>, transform_indices = @transform_5, window_bounds = array<i64: 64, 32>}, {pipeline_mode = #tpu.pipeline_mode<synchronous>, transform_indices = @transform_6, window_bounds = array<i64: 1, 32>}, {transform_indices = @transform_7, window_bounds = array<i64: 1, 16, 32>}]} {
    %c0 = arith.constant 0 : index
    %c0_0 = arith.constant 0 : index
    %c0_1 = arith.constant 0 : index
    %0 = vector.load %arg2[%c0, %c0_0, %c0_1] : memref<1x16x32xf32, #tpu.memory_space<vmem>>, vector<1x16x32xf32>
    %1 = vector.shape_cast %0 : vector<1x16x32xf32> to vector<16x32xf32>
    %2 = arith.truncf %1 : vector<16x32xf32> to vector<16x32xbf16>
    %c0_i32 = arith.constant 0 : i32
    %3 = arith.cmpi sgt, %arg1, %c0_i32 : i32
    %c0_2 = arith.constant 0 : index
    %c0_3 = arith.constant 0 : index
    %c0_4 = arith.constant 0 : index
    %4 = vector.load %arg3[%c0_2, %c0_3, %c0_4] : memref<1x8x32xf32, #tpu.memory_space<vmem>>, vector<1x8x32xf32>
    %5 = vector.shape_cast %4 : vector<1x8x32xf32> to vector<8x32xf32>
    %cst = arith.constant 0.000000e+00 : f32
    %6 = vector.broadcast %cst : f32 to vector<8x32xf32>
    %7 = arith.select %3, %5, %6 : vector<8x32xf32>
    %8 = arith.truncf %7 : vector<8x32xf32> to vector<8x32xbf16>
    %c3_i32 = arith.constant 3 : i32
    %9 = arith.cmpi slt, %arg1, %c3_i32 : i32
    %c0_5 = arith.constant 0 : index
    %c0_6 = arith.constant 0 : index
    %c0_7 = arith.constant 0 : index
    %10 = vector.load %arg4[%c0_5, %c0_6, %c0_7] : memref<1x8x32xf32, #tpu.memory_space<vmem>>, vector<1x8x32xf32>
    %11 = vector.shape_cast %10 : vector<1x8x32xf32> to vector<8x32xf32>
    %cst_8 = arith.constant 0.000000e+00 : f32
    %12 = vector.broadcast %cst_8 : f32 to vector<8x32xf32>
    %13 = arith.select %9, %11, %12 : vector<8x32xf32>
    %14 = arith.truncf %13 : vector<8x32xf32> to vector<8x32xbf16>
    %15 = tpu.concatenate %8, %2, %14 in 0 : vector<8x32xbf16>, vector<16x32xbf16>, vector<8x32xbf16> -> vector<32x32xbf16>
    %16 = vector.extract_strided_slice %15 {offsets = [4, 0], sizes = [16, 32], strides = [1, 1]} : vector<32x32xbf16> to vector<16x32xbf16>
    %17 = vector.extract_strided_slice %15 {offsets = [5, 0], sizes = [16, 32], strides = [1, 1]} : vector<32x32xbf16> to vector<16x32xbf16>
    %18 = vector.extract_strided_slice %15 {offsets = [6, 0], sizes = [16, 32], strides = [1, 1]} : vector<32x32xbf16> to vector<16x32xbf16>
    %19 = vector.extract_strided_slice %15 {offsets = [7, 0], sizes = [16, 32], strides = [1, 1]} : vector<32x32xbf16> to vector<16x32xbf16>
    %20 = vector.extract_strided_slice %15 {offsets = [8, 0], sizes = [16, 32], strides = [1, 1]} : vector<32x32xbf16> to vector<16x32xbf16>
    %21 = vector.extract_strided_slice %15 {offsets = [9, 0], sizes = [16, 32], strides = [1, 1]} : vector<32x32xbf16> to vector<16x32xbf16>
    %22 = vector.extract_strided_slice %15 {offsets = [10, 0], sizes = [16, 32], strides = [1, 1]} : vector<32x32xbf16> to vector<16x32xbf16>
    %23 = vector.extract_strided_slice %15 {offsets = [11, 0], sizes = [16, 32], strides = [1, 1]} : vector<32x32xbf16> to vector<16x32xbf16>
    %24 = vector.extract_strided_slice %15 {offsets = [12, 0], sizes = [16, 32], strides = [1, 1]} : vector<32x32xbf16> to vector<16x32xbf16>
    %25 = tpu.concatenate %16, %17, %18, %19, %20, %21, %22, %23, %24 in 1 : vector<16x32xbf16>, vector<16x32xbf16>, vector<16x32xbf16>, vector<16x32xbf16>, vector<16x32xbf16>, vector<16x32xbf16>, vector<16x32xbf16>, vector<16x32xbf16>, vector<16x32xbf16> -> vector<16x288xbf16>
    %c0_9 = arith.constant 0 : index
    %c0_10 = arith.constant 0 : index
    %26 = vector.load %arg5[%c0_9, %c0_10] : memref<288x64xbf16, #tpu.memory_space<vmem>>, vector<288x64xbf16>
    %cst_11 = arith.constant dense<0.000000e+00> : vector<16x64xf32>
    %27 = tpu.matmul %25, %26, %cst_11 {dimension_numbers = #tpu.dot_dimension_numbers<[1], [0], [0], [1], [0, 0, 1, 1], [], []>} : vector<16x288xbf16>, vector<288x64xbf16>, vector<16x64xf32> -> vector<16x64xf32>
    %c0_12 = arith.constant 0 : index
    %c0_13 = arith.constant 0 : index
    %28 = vector.load %arg6[%c0_12, %c0_13] : memref<1x64xf32, #tpu.memory_space<vmem>>, vector<1x64xf32>
    %29 = vector.broadcast %28 : vector<1x64xf32> to vector<16x64xf32>
    %30 = arith.addf %27, %29 : vector<16x64xf32>
    %cst_14 = arith.constant 0.000000e+00 : f32
    %31 = vector.broadcast %cst_14 : f32 to vector<16x64xf32>
    %32 = arith.maximumf %30, %31 : vector<16x64xf32>
    %33 = arith.truncf %32 : vector<16x64xf32> to vector<16x64xbf16>
    %c0_15 = arith.constant 0 : index
    %c0_16 = arith.constant 0 : index
    %34 = vector.load %arg7[%c0_15, %c0_16] : memref<64x32xbf16, #tpu.memory_space<vmem>>, vector<64x32xbf16>
    %cst_17 = arith.constant dense<0.000000e+00> : vector<16x32xf32>
    %35 = tpu.matmul %33, %34, %cst_17 {dimension_numbers = #tpu.dot_dimension_numbers<[1], [0], [0], [1], [0, 0, 1, 1], [], []>} : vector<16x64xbf16>, vector<64x32xbf16>, vector<16x32xf32> -> vector<16x32xf32>
    %c0_18 = arith.constant 0 : index
    %c0_19 = arith.constant 0 : index
    %36 = vector.load %arg8[%c0_18, %c0_19] : memref<1x32xf32, #tpu.memory_space<vmem>>, vector<1x32xf32>
    %37 = vector.broadcast %36 : vector<1x32xf32> to vector<16x32xf32>
    %38 = arith.addf %35, %37 : vector<16x32xf32>
    %39 = arith.addf %38, %1 : vector<16x32xf32>
    %c0_20 = arith.constant 0 : index
    %c0_21 = arith.constant 0 : index
    %c0_22 = arith.constant 0 : index
    %40 = vector.load %arg9[%c0_20, %c0_21, %c0_22] : memref<1x16x32xf32, #tpu.memory_space<vmem>>, vector<1x16x32xf32>
    %41 = vector.shape_cast %40 : vector<1x16x32xf32> to vector<16x32xf32>
    %42 = vector.shape_cast %39 : vector<16x32xf32> to vector<1x16x32xf32>
    tpu.vector_store %arg9[%c0_20, %c0_21, %c0_22], %42 {strides = array<i32>} : memref<1x16x32xf32, #tpu.memory_space<vmem>>, vector<1x16x32xf32>,
    return
  }
  func.func @transform_0(%arg0: i32, %arg1: i32) -> (i32, i32, i32) {
    %c0_i32 = arith.constant 0 : i32
    %c0_i32_0 = arith.constant 0 : i32
    return %arg0, %arg1, %c0_i32 : i32, i32, i32
  }
  func.func @transform_1(%arg0: i32, %arg1: i32) -> (i32, i32, i32) {
    %c2_i32 = arith.constant 2 : i32
    %0 = arith.muli %arg1, %c2_i32 : i32
    %c1_i32 = arith.constant 1 : i32
    %1 = arith.subi %0, %c1_i32 : i32
    %c0_i32 = arith.constant 0 : i32
    %2 = arith.maxsi %1, %c0_i32 : i32
    %c0_i32_0 = arith.constant 0 : i32
    %c0_i32_1 = arith.constant 0 : i32
    return %arg0, %2, %c0_i32_0 : i32, i32, i32
  }
  func.func @transform_2(%arg0: i32, %arg1: i32) -> (i32, i32, i32) {
    %c1_i32 = arith.constant 1 : i32
    %0 = arith.addi %arg1, %c1_i32 : i32
    %c2_i32 = arith.constant 2 : i32
    %1 = arith.muli %0, %c2_i32 : i32
    %c7_i32 = arith.constant 7 : i32
    %2 = arith.minsi %1, %c7_i32 : i32
    %c0_i32 = arith.constant 0 : i32
    %c0_i32_0 = arith.constant 0 : i32
    return %arg0, %2, %c0_i32 : i32, i32, i32
  }
  func.func @transform_3(%arg0: i32, %arg1: i32) -> (i32, i32) {
    %c0_i32 = arith.constant 0 : i32
    %c0_i32_0 = arith.constant 0 : i32
    %c0_i32_1 = arith.constant 0 : i32
    return %c0_i32, %c0_i32_0 : i32, i32
  }
  func.func @transform_4(%arg0: i32, %arg1: i32) -> (i32, i32) {
    %c0_i32 = arith.constant 0 : i32
    %c0_i32_0 = arith.constant 0 : i32
    %c0_i32_1 = arith.constant 0 : i32
    return %c0_i32, %c0_i32_0 : i32, i32
  }
  func.func @transform_5(%arg0: i32, %arg1: i32) -> (i32, i32) {
    %c0_i32 = arith.constant 0 : i32
    %c0_i32_0 = arith.constant 0 : i32
    %c0_i32_1 = arith.constant 0 : i32
    return %c0_i32, %c0_i32_0 : i32, i32
  }
  func.func @transform_6(%arg0: i32, %arg1: i32) -> (i32, i32) {
    %c0_i32 = arith.constant 0 : i32
    %c0_i32_0 = arith.constant 0 : i32
    %c0_i32_1 = arith.constant 0 : i32
    return %c0_i32, %c0_i32_0 : i32, i32
  }
  func.func @transform_7(%arg0: i32, %arg1: i32) -> (i32, i32, i32) {
    %c0_i32 = arith.constant 0 : i32
    %c0_i32_0 = arith.constant 0 : i32
    return %arg0, %arg1, %c0_i32 : i32, i32, i32
  }
}

module attributes {stable_mosaic.version = 11 : i64} {
  func.func @_ffn_kernel(%arg0: i32, %arg1: i32, %arg2: memref<1x16x32xf32, #tpu.memory_space<vmem>>, %arg3: memref<1x8x32xf32, #tpu.memory_space<vmem>>, %arg4: memref<1x8x32xf32, #tpu.memory_space<vmem>>, %arg5: memref<288x64xbf16, #tpu.memory_space<vmem>>, %arg6: memref<1x64xf32, #tpu.memory_space<vmem>>, %arg7: memref<64x32xbf16, #tpu.memory_space<vmem>>, %arg8: memref<1x32xf32, #tpu.memory_space<vmem>>, %arg9: memref<1x16x32xf32, #tpu.memory_space<vmem>>) attributes {dimension_semantics = [#tpu.dimension_semantics<parallel>, #tpu.dimension_semantics<parallel>], iteration_bounds = array<i64: 2, 4>, scalar_prefetch = 0 : i64, scratch_operands = 0 : i64, tpu.core_type = #tpu.core_type<tc>, window_params = [{transform_indices = @transform_0, window_bounds = array<i64: 1, 16, 32>}, {transform_indices = @transform_1, window_bounds = array<i64: 1, 8, 32>}, {transform_indices = @transform_2, window_bounds = array<i64: 1, 8, 32>}, {pipeline_mode = #tpu.pipeline_mode<synchronous>, transform_indices = @transform_3, window_bounds = array<i64: 288, 64>}, {pipeline_mode = #tpu.pipeline_mode<synchronous>, transform_indices = @transform_4, window_bounds = array<i64: 1, 64>}, {pipeline_mode = #tpu.pipeline_mode<synchronous>, transform_indices = @transform_5, window_bounds = array<i64: 64, 32>}, {pipeline_mode = #tpu.pipeline_mode<synchronous>, transform_indices = @transform_6, window_bounds = array<i64: 1, 32>}, {transform_indices = @transform_7, window_bounds = array<i64: 1, 16, 32>}]} {
    %c0 = arith.constant 0 : index
    %c0_0 = arith.constant 0 : index
    %c0_1 = arith.constant 0 : index
    %0 = vector.load %arg2[%c0, %c0_0, %c0_1] : memref<1x16x32xf32, #tpu.memory_space<vmem>>, vector<1x16x32xf32>
    %1 = vector.shape_cast %0 : vector<1x16x32xf32> to vector<16x32xf32>
    %2 = arith.truncf %1 : vector<16x32xf32> to vector<16x32xbf16>
    %c0_i32 = arith.constant 0 : i32
    %3 = arith.cmpi sgt, %arg1, %c0_i32 : i32
    %c0_2 = arith.constant 0 : index
    %c0_3 = arith.constant 0 : index
    %c0_4 = arith.constant 0 : index
    %4 = vector.load %arg3[%c0_2, %c0_3, %c0_4] : memref<1x8x32xf32, #tpu.memory_space<vmem>>, vector<1x8x32xf32>
    %5 = vector.shape_cast %4 : vector<1x8x32xf32> to vector<8x32xf32>
    %cst = arith.constant 0.000000e+00 : f32
    %6 = vector.broadcast %cst : f32 to vector<8x32xf32>
    %7 = arith.select %3, %5, %6 : vector<8x32xf32>
    %8 = arith.truncf %7 : vector<8x32xf32> to vector<8x32xbf16>
    %c3_i32 = arith.constant 3 : i32
    %9 = arith.cmpi slt, %arg1, %c3_i32 : i32
    %c0_5 = arith.constant 0 : index
    %c0_6 = arith.constant 0 : index
    %c0_7 = arith.constant 0 : index
    %10 = vector.load %arg4[%c0_5, %c0_6, %c0_7] : memref<1x8x32xf32, #tpu.memory_space<vmem>>, vector<1x8x32xf32>
    %11 = vector.shape_cast %10 : vector<1x8x32xf32> to vector<8x32xf32>
    %cst_8 = arith.constant 0.000000e+00 : f32
    %12 = vector.broadcast %cst_8 : f32 to vector<8x32xf32>
    %13 = arith.select %9, %11, %12 : vector<8x32xf32>
    %14 = arith.truncf %13 : vector<8x32xf32> to vector<8x32xbf16>
    %15 = tpu.concatenate %8, %2, %14 in 0 : vector<8x32xbf16>, vector<16x32xbf16>, vector<8x32xbf16> -> vector<32x32xbf16>
    %16 = vector.extract_strided_slice %15 {offsets = [4, 0], sizes = [16, 32], strides = [1, 1]} : vector<32x32xbf16> to vector<16x32xbf16>
    %17 = vector.extract_strided_slice %15 {offsets = [5, 0], sizes = [16, 32], strides = [1, 1]} : vector<32x32xbf16> to vector<16x32xbf16>
    %18 = vector.extract_strided_slice %15 {offsets = [6, 0], sizes = [16, 32], strides = [1, 1]} : vector<32x32xbf16> to vector<16x32xbf16>
    %19 = vector.extract_strided_slice %15 {offsets = [7, 0], sizes = [16, 32], strides = [1, 1]} : vector<32x32xbf16> to vector<16x32xbf16>
    %20 = vector.extract_strided_slice %15 {offsets = [8, 0], sizes = [16, 32], strides = [1, 1]} : vector<32x32xbf16> to vector<16x32xbf16>
    %21 = vector.extract_strided_slice %15 {offsets = [9, 0], sizes = [16, 32], strides = [1, 1]} : vector<32x32xbf16> to vector<16x32xbf16>
    %22 = vector.extract_strided_slice %15 {offsets = [10, 0], sizes = [16, 32], strides = [1, 1]} : vector<32x32xbf16> to vector<16x32xbf16>
    %23 = vector.extract_strided_slice %15 {offsets = [11, 0], sizes = [16, 32], strides = [1, 1]} : vector<32x32xbf16> to vector<16x32xbf16>
    %24 = vector.extract_strided_slice %15 {offsets = [12, 0], sizes = [16, 32], strides = [1, 1]} : vector<32x32xbf16> to vector<16x32xbf16>
    %25 = tpu.concatenate %16, %17, %18, %19, %20, %21, %22, %23, %24 in 1 : vector<16x32xbf16>, vector<16x32xbf16>, vector<16x32xbf16>, vector<16x32xbf16>, vector<16x32xbf16>, vector<16x32xbf16>, vector<16x32xbf16>, vector<16x32xbf16>, vector<16x32xbf16> -> vector<16x288xbf16>
    %c0_9 = arith.constant 0 : index
    %c0_10 = arith.constant 0 : index
    %26 = vector.load %arg5[%c0_9, %c0_10] : memref<288x64xbf16, #tpu.memory_space<vmem>>, vector<288x64xbf16>
    %cst_11 = arith.constant dense<0.000000e+00> : vector<16x64xf32>
    %27 = tpu.matmul %25, %26, %cst_11 {dimension_numbers = #tpu.dot_dimension_numbers<[1], [0], [0], [1], [0, 0, 1, 1], [], []>} : vector<16x288xbf16>, vector<288x64xbf16>, vector<16x64xf32> -> vector<16x64xf32>
    %c0_12 = arith.constant 0 : index
    %c0_13 = arith.constant 0 : index
    %28 = vector.load %arg6[%c0_12, %c0_13] : memref<1x64xf32, #tpu.memory_space<vmem>>, vector<1x64xf32>
    %29 = vector.broadcast %28 : vector<1x64xf32> to vector<16x64xf32>
    %30 = arith.addf %27, %29 : vector<16x64xf32>
    %cst_14 = arith.constant 0.000000e+00 : f32
    %31 = vector.broadcast %cst_14 : f32 to vector<16x64xf32>
    %32 = arith.maximumf %30, %31 : vector<16x64xf32>
    %33 = arith.truncf %32 : vector<16x64xf32> to vector<16x64xbf16>
    %c0_15 = arith.constant 0 : index
    %c0_16 = arith.constant 0 : index
    %34 = vector.load %arg7[%c0_15, %c0_16] : memref<64x32xbf16, #tpu.memory_space<vmem>>, vector<64x32xbf16>
    %cst_17 = arith.constant dense<0.000000e+00> : vector<16x32xf32>
    %35 = tpu.matmul %33, %34, %cst_17 {dimension_numbers = #tpu.dot_dimension_numbers<[1], [0], [0], [1], [0, 0, 1, 1], [], []>} : vector<16x64xbf16>, vector<64x32xbf16>, vector<16x32xf32> -> vector<16x32xf32>
    %c0_18 = arith.constant 0 : index
    %c0_19 = arith.constant 0 : index
    %36 = vector.load %arg8[%c0_18, %c0_19] : memref<1x32xf32, #tpu.memory_space<vmem>>, vector<1x32xf32>
    %37 = vector.broadcast %36 : vector<1x32xf32> to vector<16x32xf32>
    %38 = arith.addf %35, %37 : vector<16x32xf32>
    %39 = arith.addf %38, %1 : vector<16x32xf32>
    %c0_20 = arith.constant 0 : index
    %c0_21 = arith.constant 0 : index
    %c0_22 = arith.constant 0 : index
    %40 = vector.load %arg9[%c0_20, %c0_21, %c0_22] : memref<1x16x32xf32, #tpu.memory_space<vmem>>, vector<1x16x32xf32>
    %41 = vector.shape_cast %40 : vector<1x16x32xf32> to vector<16x32xf32>
    %42 = vector.shape_cast %39 : vector<16x32xf32> to vector<1x16x32xf32>
    tpu.vector_store %arg9[%c0_20, %c0_21, %c0_22], %42 {strides = array<i32>} : memref<1x16x32xf32, #tpu.memory_space<vmem>>, vector<1x16x32xf32>,
    return
  }
  func.func @transform_0(%arg0: i32, %arg1: i32) -> (i32, i32, i32) {
    %c0_i32 = arith.constant 0 : i32
    %c0_i32_0 = arith.constant 0 : i32
    return %arg0, %arg1, %c0_i32 : i32, i32, i32
  }
  func.func @transform_1(%arg0: i32, %arg1: i32) -> (i32, i32, i32) {
    %c2_i32 = arith.constant 2 : i32
    %0 = arith.muli %arg1, %c2_i32 : i32
    %c1_i32 = arith.constant 1 : i32
    %1 = arith.subi %0, %c1_i32 : i32
    %c0_i32 = arith.constant 0 : i32
    %2 = arith.maxsi %1, %c0_i32 : i32
    %c0_i32_0 = arith.constant 0 : i32
    %c0_i32_1 = arith.constant 0 : i32
    return %arg0, %2, %c0_i32_0 : i32, i32, i32
  }
  func.func @transform_2(%arg0: i32, %arg1: i32) -> (i32, i32, i32) {
    %c1_i32 = arith.constant 1 : i32
    %0 = arith.addi %arg1, %c1_i32 : i32
    %c2_i32 = arith.constant 2 : i32
    %1 = arith.muli %0, %c2_i32 : i32
    %c7_i32 = arith.constant 7 : i32
    %2 = arith.minsi %1, %c7_i32 : i32
    %c0_i32 = arith.constant 0 : i32
    %c0_i32_0 = arith.constant 0 : i32
    return %arg0, %2, %c0_i32 : i32, i32, i32
  }
  func.func @transform_3(%arg0: i32, %arg1: i32) -> (i32, i32) {
    %c0_i32 = arith.constant 0 : i32
    %c0_i32_0 = arith.constant 0 : i32
    %c0_i32_1 = arith.constant 0 : i32
    return %c0_i32, %c0_i32_0 : i32, i32
  }
  func.func @transform_4(%arg0: i32, %arg1: i32) -> (i32, i32) {
    %c0_i32 = arith.constant 0 : i32
    %c0_i32_0 = arith.constant 0 : i32
    %c0_i32_1 = arith.constant 0 : i32
    return %c0_i32, %c0_i32_0 : i32, i32
  }
  func.func @transform_5(%arg0: i32, %arg1: i32) -> (i32, i32) {
    %c0_i32 = arith.constant 0 : i32
    %c0_i32_0 = arith.constant 0 : i32
    %c0_i32_1 = arith.constant 0 : i32
    return %c0_i32, %c0_i32_0 : i32, i32
  }
  func.func @transform_6(%arg0: i32, %arg1: i32) -> (i32, i32) {
    %c0_i32 = arith.constant 0 : i32
    %c0_i32_0 = arith.constant 0 : i32
    %c0_i32_1 = arith.constant 0 : i32
    return %c0_i32, %c0_i32_0 : i32, i32
  }
  func.func @transform_7(%arg0: i32, %arg1: i32) -> (i32, i32, i32) {
    %c0_i32 = arith.constant 0 : i32
    %c0_i32_0 = arith.constant 0 : i32
    return %arg0, %arg1, %c0_i32 : i32, i32, i32
  }
}

</mosaic_0001>

<llo_original>
// kernel: tpu_custom_call.1
$region0: #{tpu_custom_call.1}
  #allocation0 [shape = 'u32[]', space=smem, size = 0x4, offset = 0x4, fixed_abs, tag = 'smem constant byte address 0x4 - core index']
  #allocation1 [shape = 'u32[144,128]{1,0:T(1,128)}', space=vmem, size = 0x12000, scoped, tag = 'internal scratch']
  %s0 = inlined_call_operand.vmem [shape: f32[2,64,32], index: 0, kind: input, shape index: {}]
  %s1 = inlined_call_operand.vmem [shape: f32[2,64,32], index: 1, kind: input, shape index: {}]
  %s2 = inlined_call_operand.vmem [shape: f32[2,64,32], index: 2, kind: input, shape index: {}]
  %s3 = inlined_call_operand.vmem [shape: bf16[288,64], index: 3, kind: input, shape index: {}]
  %s4 = inlined_call_operand.vmem [shape: f32[1,64], index: 4, kind: input, shape index: {}]
  %s5 = inlined_call_operand.vmem [shape: bf16[64,32], index: 5, kind: input, shape index: {}]
  %s6 = inlined_call_operand.vmem [shape: f32[1,32], index: 6, kind: input, shape index: {}]
  %s7 = inlined_call_operand.vmem [shape: f32[2,64,32], index: 7, kind: output, shape index: {}]
  %s8 = sld [smem:[#allocation0]]
  $region61: #{tpu_custom_call.1} parent=0
    _
  %s10 = ssub.s32 1, %s8
  %s11 = scalar_select 0, %s10, %s8
  loop: start=0, step=1, limit=10
  $region2: #{tpu_custom_call.1} parent=0 // loop_pre_header
    _
  $region3: #{tpu_custom_call.1} parent=0 // loop_header
    %s13 = sphi 0, %s17
    %p14 = scmp.ge.s32.totalorder %s13, 10
    %s20 = sphi 0, %s32
    %s21 = sphi 0, %s28
    %s22 = sphi 0, %s20
    %s23 = sphi 0, %s21
    %s24 = sphi 0, %s22
    %s25 = sphi 0, %s23
    %s37 = sphi 0, %s39
    %s40 = sphi 0, %s37
    %s41 = sphi 0, %s40
    %s57 = sphi 0, %s41
    %s73 = sphi 0, %s75
    %s76 = sphi 0, %s73
    %s77 = sphi 0, %s76
    %s93 = sphi 0, %s77
    %s109 = sphi 0, %s111
    %s112 = sphi 0, %s109
    %s113 = sphi 0, %s112
    %s129 = sphi 0, %s113
    %s133 = sphi 0, %s133
    %s135 = sphi 0, %s133
    %s136 = sphi 0, %s135
    %s150 = sphi 0, %s136
    %s154 = sphi 0, %s154
    %s156 = sphi 0, %s154
    %s157 = sphi 0, %s156
    %s171 = sphi 0, %s157
    %s175 = sphi 0, %s175
    %s177 = sphi 0, %s175
    %s178 = sphi 0, %s177
    %s192 = sphi 0, %s178
    %s196 = sphi 0, %s196
    %s198 = sphi 0, %s196
    %s199 = sphi 0, %s198
    %s213 = sphi 0, %s199
    %s221 = sphi 0, %s223
    %s224 = sphi 0, %s221
    %s225 = sphi 0, %s224
    %s241 = sphi 0, %s225
  $region4: #{tpu_custom_call.1} parent=0 // loop_header_branch
    %16 = sbr.rel (%p14) target = $region8
  $region5: #{tpu_custom_call.1} parent=0 // loop_body
    %s18 = ssub.s32 %s13, 1
    %s19 = ssub.s32 %s13, 2
    %s26 = sadd.s32 1, %s21
    %p27 = scmp.ge.s32.totalorder %s26, 4
    %s28 = scalar_select %p27, 0, %s26
    %s29 = sadd.s32 1, %s20
    %s30 = scalar_select %p27, %s29, %s20
    %p31 = scmp.ge.s32.totalorder %s30, 2
    %s32 = scalar_select %p31, 0, %s30
    %s33 = ssub.s32 %s20, %s32
    %s34 = ssub.s32 %s21, %s28
    %s35 = sor.u32 %s33, %s34
    %p36 = scmp.eq.s32.totalorder %s35, 0
    %s38 = sadd.s32 %s37, 1
    %s39 = scalar_select %p36, %s37, %s38
    %p42 = pneg %p36
    %p43 = scmp.eq.s32.totalorder %s13, 7
    %p44 = por %p42, %p43
    %p45 = scmp.ne.s32.totalorder %s37, %s40
    %p46 = scmp.eq.s32.totalorder %s13, 0
    %p47 = por %p45, %p46
    %p48 = scmp.ne.s32.totalorder %s37, %s40
    %p49 = scmp.eq.s32.totalorder %s18, 7
    %p50 = por %p48, %p49
    %p51 = scmp.ne.s32.totalorder %s40, %s41
    %p52 = scmp.eq.s32.totalorder %s18, 0
    %p53 = por %p51, %p52
    %p54 = scmp.ne.s32.totalorder %s40, %s41
    %p55 = scmp.eq.s32.totalorder %s19, 7
    %p56 = por %p54, %p55
    %p58 = scmp.ne.s32.totalorder %s41, %s57
    %p59 = scmp.eq.s32.totalorder %s19, 0
    %p60 = por %p58, %p59
    %s61 = smul.u32 %s21, 2
    %s62 = ssub.s32 %s61, 1
    %p63 = scmp.gt.s32.totalorder %s62, 0
    %s64 = scalar_select %p63, %s62, 0
    %s65 = smul.u32 %s28, 2
    %s66 = ssub.s32 %s65, 1
    %p67 = scmp.gt.s32.totalorder %s66, 0
    %s68 = scalar_select %p67, %s66, 0
    %s69 = ssub.s32 %s20, %s32
    %s70 = ssub.s32 %s64, %s68
    %s71 = sor.u32 %s69, %s70
    %p72 = scmp.eq.s32.totalorder %s71, 0
    %s74 = sadd.s32 %s73, 1
    %s75 = scalar_select %p72, %s73, %s74
    %p78 = pneg %p72
    %p79 = scmp.eq.s32.totalorder %s13, 7
    %p80 = por %p78, %p79
    %p81 = scmp.ne.s32.totalorder %s73, %s76
    %p82 = scmp.eq.s32.totalorder %s13, 0
    %p83 = por %p81, %p82
    %p84 = scmp.ne.s32.totalorder %s73, %s76
    %p85 = scmp.eq.s32.totalorder %s18, 7
    %p86 = por %p84, %p85
    %p87 = scmp.ne.s32.totalorder %s76, %s77
    %p88 = scmp.eq.s32.totalorder %s18, 0
    %p89 = por %p87, %p88
    %p90 = scmp.ne.s32.totalorder %s76, %s77
    %p91 = scmp.eq.s32.totalorder %s19, 7
    %p92 = por %p90, %p91
    %p94 = scmp.ne.s32.totalorder %s77, %s93
    %p95 = scmp.eq.s32.totalorder %s19, 0
    %p96 = por %p94, %p95
    %s97 = sadd.s32 %s21, 1
    %s98 = smul.u32 %s97, 2
    %p99 = scmp.lt.s32.totalorder %s98, 7
    %s100 = scalar_select %p99, %s98, 7
    %s101 = sadd.s32 %s28, 1
    %s102 = smul.u32 %s101, 2
    %p103 = scmp.lt.s32.totalorder %s102, 7
    %s104 = scalar_select %p103, %s102, 7
    %s105 = ssub.s32 %s20, %s32
    %s106 = ssub.s32 %s100, %s104
    %s107 = sor.u32 %s105, %s106
    %p108 = scmp.eq.s32.totalorder %s107, 0
    %s110 = sadd.s32 %s109, 1
    %s111 = scalar_select %p108, %s109, %s110
    %p114 = pneg %p108
    %p115 = scmp.eq.s32.totalorder %s13, 7
    %p116 = por %p114, %p115
    %p117 = scmp.ne.s32.totalorder %s109, %s112
    %p118 = scmp.eq.s32.totalorder %s13, 0
    %p119 = por %p117, %p118
    %p120 = scmp.ne.s32.totalorder %s109, %s112
    %p121 = scmp.eq.s32.totalorder %s18, 7
    %p122 = por %p120, %p121
    %p123 = scmp.ne.s32.totalorder %s112, %s113
    %p124 = scmp.eq.s32.totalorder %s18, 0
    %p125 = por %p123, %p124
    %p126 = scmp.ne.s32.totalorder %s112, %s113
    %p127 = scmp.eq.s32.totalorder %s19, 7
    %p128 = por %p126, %p127
    %p130 = scmp.ne.s32.totalorder %s113, %s129
    %p131 = scmp.eq.s32.totalorder %s19, 0
    %p132 = por %p130, %p131
    %s134 = sadd.s32 %s133, 1
    %p137 = scmp.eq.s32.totalorder %s13, 7
    %p138 = scmp.ne.s32.totalorder %s133, %s135
    %p139 = scmp.eq.s32.totalorder %s13, 0
    %p140 = por %p138, %p139
    %p141 = scmp.ne.s32.totalorder %s133, %s135
    %p142 = scmp.eq.s32.totalorder %s18, 7
    %p143 = por %p141, %p142
    %p144 = scmp.ne.s32.totalorder %s135, %s136
    %p145 = scmp.eq.s32.totalorder %s18, 0
    %p146 = por %p144, %p145
    %p147 = scmp.ne.s32.totalorder %s135, %s136
    %p148 = scmp.eq.s32.totalorder %s19, 7
    %p149 = por %p147, %p148
    %p151 = scmp.ne.s32.totalorder %s136, %s150
    %p152 = scmp.eq.s32.totalorder %s19, 0
    %p153 = por %p151, %p152
    %s155 = sadd.s32 %s154, 1
    %p158 = scmp.eq.s32.totalorder %s13, 7
    %p159 = scmp.ne.s32.totalorder %s154, %s156
    %p160 = scmp.eq.s32.totalorder %s13, 0
    %p161 = por %p159, %p160
    %p162 = scmp.ne.s32.totalorder %s154, %s156
    %p163 = scmp.eq.s32.totalorder %s18, 7
    %p164 = por %p162, %p163
    %p165 = scmp.ne.s32.totalorder %s156, %s157
    %p166 = scmp.eq.s32.totalorder %s18, 0
    %p167 = por %p165, %p166
    %p168 = scmp.ne.s32.totalorder %s156, %s157
    %p169 = scmp.eq.s32.totalorder %s19, 7
    %p170 = por %p168, %p169
    %p172 = scmp.ne.s32.totalorder %s157, %s171
    %p173 = scmp.eq.s32.totalorder %s19, 0
    %p174 = por %p172, %p173
    %s176 = sadd.s32 %s175, 1
    %p179 = scmp.eq.s32.totalorder %s13, 7
    %p180 = scmp.ne.s32.totalorder %s175, %s177
    %p181 = scmp.eq.s32.totalorder %s13, 0
    %p182 = por %p180, %p181
    %p183 = scmp.ne.s32.totalorder %s175, %s177
    %p184 = scmp.eq.s32.totalorder %s18, 7
    %p185 = por %p183, %p184
    %p186 = scmp.ne.s32.totalorder %s177, %s178
    %p187 = scmp.eq.s32.totalorder %s18, 0
    %p188 = por %p186, %p187
    %p189 = scmp.ne.s32.totalorder %s177, %s178
    %p190 = scmp.eq.s32.totalorder %s19, 7
    %p191 = por %p189, %p190
    %p193 = scmp.ne.s32.totalorder %s178, %s192
    %p194 = scmp.eq.s32.totalorder %s19, 0
    %p195 = por %p193, %p194
    %s197 = sadd.s32 %s196, 1
    %p200 = scmp.eq.s32.totalorder %s13, 7
    %p201 = scmp.ne.s32.totalorder %s196, %s198
    %p202 = scmp.eq.s32.totalorder %s13, 0
    %p203 = por %p201, %p202
    %p204 = scmp.ne.s32.totalorder %s196, %s198
    %p205 = scmp.eq.s32.totalorder %s18, 7
    %p206 = por %p204, %p205
    %p207 = scmp.ne.s32.totalorder %s198, %s199
    %p208 = scmp.eq.s32.totalorder %s18, 0
    %p209 = por %p207, %p208
    %p210 = scmp.ne.s32.totalorder %s198, %s199
    %p211 = scmp.eq.s32.totalorder %s19, 7
    %p212 = por %p210, %p211
    %p214 = scmp.ne.s32.totalorder %s199, %s213
    %p215 = scmp.eq.s32.totalorder %s19, 0
    %p216 = por %p214, %p215
    %s217 = ssub.s32 %s20, %s32
    %s218 = ssub.s32 %s21, %s28
    %s219 = sor.u32 %s217, %s218
    %p220 = scmp.eq.s32.totalorder %s219, 0
    %s222 = sadd.s32 %s221, 1
    %s223 = scalar_select %p220, %s221, %s222
    %p226 = pneg %p220
    %p227 = scmp.eq.s32.totalorder %s13, 7
    %p228 = por %p226, %p227
    %p229 = scmp.ne.s32.totalorder %s221, %s224
    %p230 = scmp.eq.s32.totalorder %s13, 0
    %p231 = por %p229, %p230
    %p232 = scmp.ne.s32.totalorder %s221, %s224
    %p233 = scmp.eq.s32.totalorder %s18, 7
    %p234 = por %p232, %p233
    %p235 = scmp.ne.s32.totalorder %s224, %s225
    %p236 = scmp.eq.s32.totalorder %s18, 0
    %p237 = por %p235, %p236
    %p238 = scmp.ne.s32.totalorder %s224, %s225
    %p239 = scmp.eq.s32.totalorder %s19, 7
    %p240 = por %p238, %p239
    %p242 = scmp.ne.s32.totalorder %s225, %s241
    %p243 = scmp.eq.s32.totalorder %s19, 0
    %p244 = por %p242, %p243
    %p245 = scmp.le.s32.totalorder 1, %s13
    %p246 = scmp.lt.s32.totalorder %s13, 9
    %p247 = pnand %p245, %p246
    %p248 = pneg %p247
    // Predicated region
    $region9: #{tpu_custom_call.1} parent=5 // pred_check
      _
    $region10: #{tpu_custom_call.1} parent=5 // pred_check_branch
      %250 = sbr.rel (%p247) target = $region12
    $region11: #{tpu_custom_call.1} parent=5 // pred_region
      %s251 = ssub.s32 %s13, 1
      // Predicated region
      $region13: #{tpu_custom_call.1} parent=11 // pred_check
        %p252 = pneg %p146
      $region14: #{tpu_custom_call.1} parent=11 // pred_check_branch
        %254 = sbr.rel (%p252) target = $region16
      $region15: #{tpu_custom_call.1} parent=11 // pred_region
        _
      $region16: #{tpu_custom_call.1} parent=11 // pred_fallthru
        _
      // Predicated region
      $region17: #{tpu_custom_call.1} parent=11 // pred_check
        %p255 = pneg %p167
      $region18: #{tpu_custom_call.1} parent=11 // pred_check_branch
        %257 = sbr.rel (%p255) target = $region20
      $region19: #{tpu_custom_call.1} parent=11 // pred_region
        _
      $region20: #{tpu_custom_call.1} parent=11 // pred_fallthru
        _
      // Predicated region
      $region21: #{tpu_custom_call.1} parent=11 // pred_check
        %p258 = pneg %p188
      $region22: #{tpu_custom_call.1} parent=11 // pred_check_branch
        %260 = sbr.rel (%p258) target = $region24
      $region23: #{tpu_custom_call.1} parent=11 // pred_region
        _
      $region24: #{tpu_custom_call.1} parent=11 // pred_fallthru
        _
      // Predicated region
      $region25: #{tpu_custom_call.1} parent=11 // pred_check
        %p261 = pneg %p209
      $region26: #{tpu_custom_call.1} parent=11 // pred_check_branch
        %263 = sbr.rel (%p261) target = $region28
      $region27: #{tpu_custom_call.1} parent=11 // pred_region
        _
      $region28: #{tpu_custom_call.1} parent=11 // pred_fallthru
        _
    $region12: #{tpu_custom_call.1} parent=5 // pred_fallthru
      _
    %p264 = scmp.lt.s32.totalorder %s13, 8
    // Predicated region
    $region29: #{tpu_custom_call.1} parent=5 // pred_check
      %p265 = pneg %p264
    $region30: #{tpu_custom_call.1} parent=5 // pred_check_branch
      %267 = sbr.rel (%p265) target = $region32
    $region31: #{tpu_custom_call.1} parent=5 // pred_region
      // Predicated region
      $region33: #{tpu_custom_call.1} parent=31 // pred_check
        %p268 = pneg %p47
      $region34: #{tpu_custom_call.1} parent=31 // pred_check_branch
        %270 = sbr.rel (%p268) target = $region36
      $region35: #{tpu_custom_call.1} parent=31 // pred_region
        %s271 = smul.u32 2, %s21
        %p272 = scmp.lt.s32.totalorder %s20, 1
        %s273 = scalar_select %p272, %s20, 1
        %p274 = scmp.lt.s32.totalorder %s271, 7
        %s275 = scalar_select %p274, %s271, 7
        %s276 = smul.addr %s273, 8
        %s277 = sadd.s32 %s275, %s276
        %s278 = smul.addr %s277, 8
        %s279 = scalar_lea.vmem %s0, %s278
        %s280 = smul.u32 2, %s21
      $region36: #{tpu_custom_call.1} parent=31 // pred_fallthru
        _
      // Predicated region
      $region37: #{tpu_custom_call.1} parent=31 // pred_check
        %p281 = pneg %p83
      $region38: #{tpu_custom_call.1} parent=31 // pred_check_branch
        %283 = sbr.rel (%p281) target = $region40
      $region39: #{tpu_custom_call.1} parent=31 // pred_region
        %s284 = smul.u32 %s21, 2
        %s285 = ssub.s32 %s284, 1
        %p286 = scmp.gt.s32.totalorder %s285, 0
        %s287 = scalar_select %p286, %s285, 0
        %p288 = scmp.lt.s32.totalorder %s20, 1
        %s289 = scalar_select %p288, %s20, 1
        %p290 = scmp.lt.s32.totalorder %s287, 7
        %s291 = scalar_select %p290, %s287, 7
        %s292 = smul.addr %s289, 8
        %s293 = sadd.s32 %s291, %s292
        %s294 = smul.addr %s293, 8
        %s295 = scalar_lea.vmem %s1, %s294
        %s296 = smul.u32 %s21, 2
        %s297 = ssub.s32 %s296, 1
        %p298 = scmp.gt.s32.totalorder %s297, 0
        %s299 = scalar_select %p298, %s297, 0
      $region40: #{tpu_custom_call.1} parent=31 // pred_fallthru
        _
      // Predicated region
      $region41: #{tpu_custom_call.1} parent=31 // pred_check
        %p300 = pneg %p119
      $region42: #{tpu_custom_call.1} parent=31 // pred_check_branch
        %302 = sbr.rel (%p300) target = $region44
      $region43: #{tpu_custom_call.1} parent=31 // pred_region
        %s303 = sadd.s32 %s21, 1
        %s304 = smul.u32 %s303, 2
        %p305 = scmp.lt.s32.totalorder %s304, 7
        %s306 = scalar_select %p305, %s304, 7
        %p307 = scmp.lt.s32.totalorder %s20, 1
        %s308 = scalar_select %p307, %s20, 1
        %p309 = scmp.lt.s32.totalorder %s306, 7
        %s310 = scalar_select %p309, %s306, 7
        %s311 = smul.addr %s308, 8
        %s312 = sadd.s32 %s310, %s311
        %s313 = smul.addr %s312, 8
        %s314 = scalar_lea.vmem %s2, %s313
        %s315 = sadd.s32 %s21, 1
        %s316 = smul.u32 %s315, 2
        %p317 = scmp.lt.s32.totalorder %s316, 7
        %s318 = scalar_select %p317, %s316, 7
      $region44: #{tpu_custom_call.1} parent=31 // pred_fallthru
        _
    $region32: #{tpu_custom_call.1} parent=5 // pred_fallthru
      _
    %p319 = scmp.le.s32.totalorder 1, %s13
    %p320 = scmp.lt.s32.totalorder %s13, 9
    %p321 = pnand %p319, %p320
    %p322 = pneg %p321
    // Predicated region
    $region45: #{tpu_custom_call.1} parent=5 // pred_check
      _
    $region46: #{tpu_custom_call.1} parent=5 // pred_check_branch
      %324 = sbr.rel (%p321) target = $region48
    $region47: #{tpu_custom_call.1} parent=5 // pred_region
      %s325 = ssub.s32 %s13, 1
      %s326 = smul.u32 2, %s23
      %p327 = scmp.lt.s32.totalorder %s22, 1
      %s328 = scalar_select %p327, %s22, 1
      %p329 = scmp.lt.s32.totalorder %s326, 7
      %s330 = scalar_select %p329, %s326, 7
      %s331 = smul.addr %s328, 8
      %s332 = sadd.s32 %s330, %s331
      %s333 = smul.addr %s332, 8
      %s334 = scalar_lea.vmem %s0, %s333
      %p335 = pneg %p53
      %p336 = pneg %p50
      %s337 = smul.u32 %s23, 2
      %s338 = ssub.s32 %s337, 1
      %p339 = scmp.gt.s32.totalorder %s338, 0
      %s340 = scalar_select %p339, %s338, 0
      %p341 = scmp.lt.s32.totalorder %s22, 1
      %s342 = scalar_select %p341, %s22, 1
      %p343 = scmp.lt.s32.totalorder %s340, 7
      %s344 = scalar_select %p343, %s340, 7
      %s345 = smul.addr %s342, 8
      %s346 = sadd.s32 %s344, %s345
      %s347 = smul.addr %s346, 8
      %s348 = scalar_lea.vmem %s1, %s347
      %p349 = pneg %p89
      %p350 = pneg %p86
      %s351 = sadd.s32 %s23, 1
      %s352 = smul.u32 %s351, 2
      %p353 = scmp.lt.s32.totalorder %s352, 7
      %s354 = scalar_select %p353, %s352, 7
      %p355 = scmp.lt.s32.totalorder %s22, 1
      %s356 = scalar_select %p355, %s22, 1
      %p357 = scmp.lt.s32.totalorder %s354, 7
      %s358 = scalar_select %p357, %s354, 7
      %s359 = smul.addr %s356, 8
      %s360 = sadd.s32 %s358, %s359
      %s361 = smul.addr %s360, 8
      %s362 = scalar_lea.vmem %s2, %s361
      %p363 = pneg %p125
      %p364 = pneg %p122
      %p365 = pneg %p146
      %p366 = pneg %p143
      %p367 = pneg %p167
      %p368 = pneg %p164
      %p369 = pneg %p188
      %p370 = pneg %p185
      %p371 = pneg %p209
      %p372 = pneg %p206
      %p373 = pneg %p237
      %p374 = pneg %p234
      %s375 = smul.u32 2, %s23
      %p376 = scmp.lt.s32.totalorder %s22, 1
      %s377 = scalar_select %p376, %s22, 1
      %p378 = scmp.lt.s32.totalorder %s375, 7
      %s379 = scalar_select %p378, %s375, 7
      %s380 = smul.addr %s377, 8
      %s381 = sadd.s32 %s379, %s380
      %s382 = smul.addr %s381, 8
      %s383 = scalar_lea.vmem %s7, %s382
      %s384 = smul.u32 2, %s23
      %p385 = scmp.lt.s32.totalorder %s22, 1
      %s386 = scalar_select %p385, %s22, 1
      %p387 = scmp.lt.s32.totalorder %s384, 7
      %s388 = scalar_select %p387, %s384, 7
      %s389 = smul.addr %s386, 8
      %s390 = sadd.s32 %s388, %s389
      %s391 = smul.addr %s390, 8
      %s392 = scalar_lea.vmem %s0, %s391
      %s393 = smul.u32 2, %s23
      %s394 = smul.u32 %s23, 2
      %s395 = ssub.s32 %s394, 1
      %p396 = scmp.gt.s32.totalorder %s395, 0
      %s397 = scalar_select %p396, %s395, 0
      %p398 = scmp.lt.s32.totalorder %s22, 1
      %s399 = scalar_select %p398, %s22, 1
      %p400 = scmp.lt.s32.totalorder %s397, 7
      %s401 = scalar_select %p400, %s397, 7
      %s402 = smul.addr %s399, 8
      %s403 = sadd.s32 %s401, %s402
      %s404 = smul.addr %s403, 8
      %s405 = scalar_lea.vmem %s1, %s404
      %s406 = smul.u32 %s23, 2
      %s407 = ssub.s32 %s406, 1
      %p408 = scmp.gt.s32.totalorder %s407, 0
      %s409 = scalar_select %p408, %s407, 0
      %s410 = sadd.s32 %s23, 1
      %s411 = smul.u32 %s410, 2
      %p412 = scmp.lt.s32.totalorder %s411, 7
      %s413 = scalar_select %p412, %s411, 7
      %p414 = scmp.lt.s32.totalorder %s22, 1
      %s415 = scalar_select %p414, %s22, 1
      %p416 = scmp.lt.s32.totalorder %s413, 7
      %s417 = scalar_select %p416, %s413, 7
      %s418 = smul.addr %s415, 8
      %s419 = sadd.s32 %s417, %s418
      %s420 = smul.addr %s419, 8
      %s421 = scalar_lea.vmem %s2, %s420
      %s422 = sadd.s32 %s23, 1
      %s423 = smul.u32 %s422, 2
      %p424 = scmp.lt.s32.totalorder %s423, 7
      %s425 = scalar_select %p424, %s423, 7
      %s426 = smul.u32 2, %s23
      %p427 = scmp.lt.s32.totalorder %s22, 1
      %s428 = scalar_select %p427, %s22, 1
      %p429 = scmp.lt.s32.totalorder %s426, 7
      %s430 = scalar_select %p429, %s426, 7
      %s431 = smul.addr %s428, 8
      %s432 = sadd.s32 %s430, %s431
      %s433 = smul.addr %s432, 8
      %s434 = scalar_lea.vmem %s7, %s433
      %s435 = smul.u32 2, %s23
      %v437 = vld [vmem:[%s392] sm:$0xff]
      %v438 = vld [vmem:[%s392 + $0x8] sm:$0xff]
      %v439 = vpack.c.bf16 %v438, %v437
      %p440 = scmp.gt.s32.totalorder %s23, 0
      %v441 = vld [vmem:[%s405] sm:$0xff]
      %s442 = scalar_select %p440, 1, 0
      %v443 = vstv %s442
      %vm444 = vcmp.eq.s32.totalorder %v443, 1
      %v445 = vsel %vm444, %v441, 0.0
      %v446 = vpack.c.bf16 %v445, %v445
      %p447 = scmp.lt.s32.totalorder %s23, 3
      %v448 = vld [vmem:[%s421] sm:$0xff]
      %s449 = scalar_select %p447, 1, 0
      %v450 = vstv %s449
      %vm451 = vcmp.eq.s32.totalorder %v450, 1
      %v452 = vsel %vm451, %v448, 0.0
      %v453 = vpack.c.bf16 %v452, %v452
      %v455 = vrot.slane %v439, 4
      %v457 = vrot.slane %v453, 4
      %vm458 = vcmask 1043456
      %v461 = vsel %vm458, %v446, %v455
      %v463 = vsel %vm458, %v455, %v457
      %vm464 = vsmask.f32 7424
      %v465 = vshrl.u32 %v461, 16
      %v467 = vshll.u32 %v461, 16
      %v469 = vrot.slane %v467, 1
      %v470 = vor.u32 %v465, %v469
      %v471 = vshll.u32 %v463, 16
      %v473 = vrot.slane %v471, 1
      %v474 = vsel %vm464, %v470, %v473
      %v475 = vshrl.u32 %v463, 16
      %v477 = vor.u32 %v475, %v473
      %478 = vrot.lane.b32.xlu0 %v474, 32
      %v479 = vpop.permute.xlu0 %478
      %480 = vrot.lane.b32.xlu0 %v477, 32
      %v481 = vpop.permute.xlu0 %480
      %vm484 = vcmask 1046528
      %v485 = vrot.slane %v461, 1
      %v486 = vrot.slane %v463, 1
      %v487 = vsel %vm484, %v485, %v486
      %488 = vrot.lane.b32.xlu0 %v487, 64
      %v489 = vpop.permute.xlu0 %488
      %490 = vrot.lane.b32.xlu0 %v486, 64
      %v491 = vpop.permute.xlu0 %490
      %vm492 = vsmask.f32 6400
      %v493 = vrot.slane %v465, 1
      %v494 = vrot.slane %v467, 2
      %v495 = vor.u32 %v493, %v494
      %v496 = vrot.slane %v475, 1
      %v497 = vrot.slane %v471, 2
      %v498 = vor.u32 %v496, %v497
      %v499 = vsel %vm492, %v495, %v498
      %500 = vrot.lane.b32.xlu0 %v499, 96
      %v501 = vpop.permute.xlu0 %500
      %502 = vrot.lane.b32.xlu0 %v498, 96
      %v503 = vpop.permute.xlu0 %502
      %vm504 = vcmask 1045504
      %v505 = vrot.slane %v461, 2
      %v506 = vrot.slane %v463, 2
      %v507 = vsel %vm504, %v505, %v506
      %vm508 = vsmask.f32 5376
      %v509 = vrot.slane %v465, 2
      %v510 = vrot.slane %v467, 3
      %v511 = vor.u32 %v509, %v510
      %v512 = vrot.slane %v475, 2
      %v513 = vrot.slane %v471, 3
      %v514 = vor.u32 %v512, %v513
      %v515 = vsel %vm508, %v511, %v514
      %516 = vrot.lane.b32.xlu0 %v515, 32
      %v517 = vpop.permute.xlu0 %516
      %518 = vrot.lane.b32.xlu0 %v514, 32
      %v519 = vpop.permute.xlu0 %518
      %vm520 = vcmask 1044480
      %v521 = vrot.slane %v461, 3
      %v522 = vrot.slane %v463, 3
      %v523 = vsel %vm520, %v521, %v522
      %524 = vrot.lane.b32.xlu0 %v523, 64
      %v525 = vpop.permute.xlu0 %524
      %526 = vrot.lane.b32.xlu0 %v522, 64
      %v527 = vpop.permute.xlu0 %526
      %vm528 = vsmask.f32 4352
      %v529 = vrot.slane %v465, 3
      %v530 = vrot.slane %v467, 4
      %v531 = vor.u32 %v529, %v530
      %v532 = vrot.slane %v475, 3
      %v533 = vrot.slane %v471, 4
      %v534 = vor.u32 %v532, %v533
      %v535 = vsel %vm528, %v531, %v534
      %536 = vrot.lane.b32.xlu0 %v535, 96
      %v537 = vpop.permute.xlu0 %536
      %538 = vrot.lane.b32.xlu0 %v534, 96
      %v539 = vpop.permute.xlu0 %538
      %vm540 = vcmask 1043456
      %v541 = vrot.slane %v461, 4
      %v542 = vrot.slane %v463, 4
      %v543 = vsel %vm540, %v541, %v542
      %vm544 = vcmask 261120
      %v546 = vsel %vm544, %v461, %v479
      %v548 = vsel %vm544, %v463, %v481
      %vm549 = vcmask 523264
      %v551 = vsel %vm549, %v546, %v489
      %v553 = vsel %vm549, %v548, %v491
      %vm554 = vcmask 785408
      %v556 = vsel %vm554, %v551, %v501
      %v558 = vsel %vm554, %v553, %v503
      %v561 = vsel %vm544, %v507, %v517
      %v564 = vsel %vm544, %v506, %v519
      %v566 = vsel %vm549, %v561, %v525
      %v568 = vsel %vm549, %v564, %v527
      %v570 = vsel %vm554, %v566, %v537
      %v572 = vsel %vm554, %v568, %v539
      %v573 = vld [vmem:[%s3] sm:$0xf]
      %v574 = vld [vmem:[%s3 + $0x4] sm:$0xf]
      %v575 = vld [vmem:[%s3 + $0x8] sm:$0xf]
      %v576 = vld [vmem:[%s3 + $0xc] sm:$0xf]
      %v577 = vld [vmem:[%s3 + $0x10] sm:$0xf]
      %v578 = vld [vmem:[%s3 + $0x14] sm:$0xf]
      %v579 = vld [vmem:[%s3 + $0x18] sm:$0xf]
      %v580 = vld [vmem:[%s3 + $0x1c] sm:$0xf]
      %v581 = vld [vmem:[%s3 + $0x20] sm:$0xf]
      %v582 = vld [vmem:[%s3 + $0x24] sm:$0xf]
      %v583 = vld [vmem:[%s3 + $0x28] sm:$0xf]
      %v584 = vld [vmem:[%s3 + $0x2c] sm:$0xf]
      %v585 = vld [vmem:[%s3 + $0x30] sm:$0xf]
      %v586 = vld [vmem:[%s3 + $0x34] sm:$0xf]
      %v587 = vld [vmem:[%s3 + $0x38] sm:$0xf]
      %v588 = vld [vmem:[%s3 + $0x3c] sm:$0xf]
      %v589 = vld [vmem:[%s3 + $0x40] sm:$0xf]
      %v590 = vld [vmem:[%s3 + $0x44] sm:$0xf]
      %v591 = vld [vmem:[%s3 + $0x48] sm:$0xf]
      %v592 = vld [vmem:[%s3 + $0x4c] sm:$0xf]
      %v593 = vld [vmem:[%s3 + $0x50] sm:$0xf]
      %v594 = vld [vmem:[%s3 + $0x54] sm:$0xf]
      %v595 = vld [vmem:[%s3 + $0x58] sm:$0xf]
      %v596 = vld [vmem:[%s3 + $0x5c] sm:$0xf]
      %v597 = vld [vmem:[%s3 + $0x60] sm:$0xf]
      %v598 = vld [vmem:[%s3 + $0x64] sm:$0xf]
      %v599 = vld [vmem:[%s3 + $0x68] sm:$0xf]
      %v600 = vld [vmem:[%s3 + $0x6c] sm:$0xf]
      %v601 = vld [vmem:[%s3 + $0x70] sm:$0xf]
      %v602 = vld [vmem:[%s3 + $0x74] sm:$0xf]
      %v603 = vld [vmem:[%s3 + $0x78] sm:$0xf]
      %v604 = vld [vmem:[%s3 + $0x7c] sm:$0xf]
      %v605 = vld [vmem:[%s3 + $0x80] sm:$0xf]
      %v606 = vld [vmem:[%s3 + $0x84] sm:$0xf]
      %v607 = vld [vmem:[%s3 + $0x88] sm:$0xf]
      %v608 = vld [vmem:[%s3 + $0x8c] sm:$0xf]
      %v609 = vld [vmem:[%s4] sm:$0x1]
      %v611 = vlaneseq
      %v612 = vshrl.u32 %v611, 7
      %v613 = vsub.s32 0, %v612
      %v614 = vrot.slane %v609, %v613
      %v620 = vrot.slane %v556, 2
      %v621 = vrot.slane %v558, 2
      %v622 = vsel %vm504, %v620, %v621
      %v623 = vrot.slane %v570, 2
      %v624 = vrot.slane %v572, 2
      %v625 = vsel %vm504, %v623, %v624
      %v626 = vrot.slane %v543, 2
      %v627 = vrot.slane %v542, 2
      %v628 = vsel %vm504, %v626, %v627
      %v667 = vunpack.c.l.b16 %v573
      %v668 = vunpack.c.l.b16 %v574
      %v669 = vunpack.c.l.b16 %v575
      %v670 = vunpack.c.l.b16 %v576
      %v671 = vunpack.c.l.b16 %v577
      %v672 = vunpack.c.l.b16 %v578
      %v673 = vunpack.c.l.b16 %v579
      %v674 = vunpack.c.l.b16 %v580
      %v675 = vunpack.c.l.b16 %v581
      %v676 = vunpack.c.l.b16 %v582
      %v677 = vunpack.c.l.b16 %v583
      %v678 = vunpack.c.l.b16 %v584
      %v679 = vunpack.c.l.b16 %v585
      %v680 = vunpack.c.l.b16 %v586
      %v681 = vunpack.c.l.b16 %v587
      %v682 = vunpack.c.l.b16 %v588
      %v683 = vunpack.c.l.b16 %v589
      %v684 = vunpack.c.l.b16 %v590
      %v685 = vunpack.c.l.b16 %v591
      %v686 = vunpack.c.l.b16 %v592
      %v687 = vunpack.c.l.b16 %v593
      %v688 = vunpack.c.l.b16 %v594
      %v689 = vunpack.c.l.b16 %v595
      %v690 = vunpack.c.l.b16 %v596
      %v691 = vunpack.c.l.b16 %v597
      %v692 = vunpack.c.l.b16 %v598
      %v693 = vunpack.c.l.b16 %v599
      %v694 = vunpack.c.l.b16 %v600
      %v695 = vunpack.c.l.b16 %v601
      %v696 = vunpack.c.l.b16 %v602
      %v697 = vunpack.c.l.b16 %v603
      %v698 = vunpack.c.l.b16 %v604
      %v699 = vunpack.c.l.b16 %v605
      %v700 = vunpack.c.l.b16 %v606
      %v701 = vunpack.c.l.b16 %v607
      %v702 = vunpack.c.l.b16 %v608
      %v703 = vpack.c.b16 %v668, %v667
      %v704 = vpack.c.b16 %v670, %v669
      %v705 = vpack.c.b16 %v672, %v671
      %v706 = vpack.c.b16 %v674, %v673
      %v707 = vpack.c.b16 %v676, %v675
      %v708 = vpack.c.b16 %v678, %v677
      %v709 = vpack.c.b16 %v680, %v679
      %v710 = vpack.c.b16 %v682, %v681
      %v711 = vpack.c.b16 %v684, %v683
      %v712 = vpack.c.b16 %v686, %v685
      %v713 = vpack.c.b16 %v688, %v687
      %v714 = vpack.c.b16 %v690, %v689
      %v715 = vpack.c.b16 %v692, %v691
      %v716 = vpack.c.b16 %v694, %v693
      %v717 = vpack.c.b16 %v696, %v695
      %v718 = vpack.c.b16 %v698, %v697
      %v719 = vpack.c.b16 %v700, %v699
      %v720 = vpack.c.b16 %v702, %v701
      %v740 = vsel %vm544, %v628, 0
      %742 = vmatprep.subr.bf16.mxu0 0
      %743 = vmatpush1.bf16.msra.mxu0 %v703
      %744 = vmatprep.subr.bf16.mxu0 0
      %745 = vmatpush1.bf16.msra.mxu0 %v704
      %746 = vmatprep.subr.bf16.mxu0 0
      %747 = vmatpush1.bf16.msra.mxu0 %v705
      %748 = vmatprep.subr.bf16.mxu0 0
      %749 = vmatpush1.bf16.msra.mxu0 %v706
      %750 = vmatprep.subr.bf16.mxu0 0
      %751 = vmatpush1.bf16.msra.mxu0 %v707
      %752 = vmatprep.subr.bf16.mxu0 0
      %753 = vmatpush1.bf16.msra.mxu0 %v708
      %754 = vmatprep.subr.bf16.mxu0 0
      %755 = vmatpush1.bf16.msra.mxu0 %v709
      %756 = vmatprep.subr.bf16.mxu0 0
      %757 = vmatpush1.bf16.msra.mxu0 %v710
      %758 = vmatprep.subr.bf16.mxu0 0
      %759 = vmatpush1.bf16.msra.mxu0 %v711
      %760 = vmatprep.subr.bf16.mxu0 0
      %761 = vmatpush1.bf16.msra.mxu0 %v712
      %762 = vmatprep.subr.bf16.mxu0 0
      %763 = vmatpush1.bf16.msra.mxu0 %v713
      %764 = vmatprep.subr.bf16.mxu0 0
      %765 = vmatpush1.bf16.msra.mxu0 %v714
      %766 = vmatprep.subr.bf16.mxu0 0
      %767 = vmatpush1.bf16.msra.mxu0 %v715
      %768 = vmatprep.subr.bf16.mxu0 0
      %769 = vmatpush1.bf16.msra.mxu0 %v716
      %770 = vmatprep.subr.bf16.mxu0 0
      %771 = vmatpush1.bf16.msra.mxu0 %v717
      %772 = vmatprep.subr.bf16.mxu0 0
      %773 = vmatpush1.bf16.msra.mxu0 %v718
      %774 = vmatprep.mubr.bf16.mxu0 %v625
      %775 = vmatmul.mubr.bf16.gmra.mrb[0].mxu0 %v622
      %v776 = vpop.f32.mrb[0].mxu0
      %v777 = vadd.f32 %v614, %v776
      %v778 = vpop.f32.mrb[0].mxu0
      %v779 = vpop.f32.mrb[0].mxu0
      %v780 = vadd.f32 %v614, %v779
      %v781 = vpop.f32.mrb[0].mxu0
      %782 = vdwg.mxu0
      %783 = vmatprep.subr.bf16.mxu0 0
      %784 = vmatpush1.bf16.msra.mxu0 %v719
      %785 = vmatprep.subr.bf16.mxu0 0
      %786 = vmatpush1.bf16.msra.mxu0 %v720
      %787 = vmatprep.subr.bf16.mxu0 0
      %788 = vmatpush1.bf16.msra.mxu0 0
      %789 = vmatprep.subr.bf16.mxu0 0
      %790 = vmatpush1.bf16.msra.mxu0 0
      %791 = vmatprep.subr.bf16.mxu0 0
      %792 = vmatpush1.bf16.msra.mxu0 0
      %793 = vmatprep.subr.bf16.mxu0 0
      %794 = vmatpush1.bf16.msra.mxu0 0
      %795 = vmatprep.subr.bf16.mxu0 0
      %796 = vmatpush1.bf16.msra.mxu0 0
      %797 = vmatprep.subr.bf16.mxu0 0
      %798 = vmatpush1.bf16.msra.mxu0 0
      %799 = vmatprep.subr.bf16.mxu0 0
      %800 = vmatpush1.bf16.msra.mxu0 0
      %801 = vmatprep.subr.bf16.mxu0 0
      %802 = vmatpush1.bf16.msra.mxu0 0
      %803 = vmatprep.subr.bf16.mxu0 0
      %804 = vmatpush1.bf16.msra.mxu0 0
      %805 = vmatprep.subr.bf16.mxu0 0
      %806 = vmatpush1.bf16.msra.mxu0 0
      %807 = vmatprep.subr.bf16.mxu0 0
      %808 = vmatpush1.bf16.msra.mxu0 0
      %809 = vmatprep.subr.bf16.mxu0 0
      %810 = vmatpush1.bf16.msra.mxu0 0
      %811 = vmatprep.subr.bf16.mxu0 0
      %812 = vmatpush1.bf16.msra.mxu0 0
      %813 = vmatprep.subr.bf16.mxu0 0
      %814 = vmatpush1.bf16.msra.mxu0 0
      %815 = vmatprep.mubr.bf16.mxu0 0
      %816 = vmatmul.mubr.bf16.gmra.mrb[0].mxu0 %v740
      %v817 = vpop.f32.mrb[0].mxu0
      %v818 = vadd.f32 %v777, %v817
      %v819 = vpop.f32.mrb[0].mxu0
      %v820 = vpop.f32.mrb[0].mxu0
      %v821 = vadd.f32 %v780, %v820
      %v822 = vpop.f32.mrb[0].mxu0
      %823 = vdwg.mxu0
      %v824 = vmax.f32 %v818, 0.0
      %v825 = vmax.f32 %v821, 0.0
      %v826 = vpack.c.bf16 %v825, %v824
      %v827 = vld [vmem:[%s5] sm:$0xf]
      %v828 = vld [vmem:[%s5 + $0x4] sm:$0xf]
      %v829 = vld [vmem:[%s5 + $0x8] sm:$0xf]
      %v830 = vld [vmem:[%s5 + $0xc] sm:$0xf]
      %v831 = vld [vmem:[%s5 + $0x10] sm:$0xf]
      %v832 = vld [vmem:[%s5 + $0x14] sm:$0xf]
      %v833 = vld [vmem:[%s5 + $0x18] sm:$0xf]
      %v834 = vld [vmem:[%s5 + $0x1c] sm:$0xf]
      %v835 = vld [vmem:[%s6] sm:$0x1]
      %v837 = vlaneseq
      %v838 = vshrl.u32 %v837, 7
      %v839 = vsub.s32 0, %v838
      %v840 = vrot.slane %v835, %v839
      %v850 = vunpack.c.l.b16 %v827
      %v851 = vunpack.c.l.b16 %v828
      %v852 = vunpack.c.l.b16 %v829
      %v853 = vunpack.c.l.b16 %v830
      %v854 = vunpack.c.l.b16 %v831
      %v855 = vunpack.c.l.b16 %v832
      %v856 = vunpack.c.l.b16 %v833
      %v857 = vunpack.c.l.b16 %v834
      %v858 = vpack.c.b16 %v851, %v850
      %v859 = vpack.c.b16 %v853, %v852
      %v860 = vpack.c.b16 %v855, %v854
      %v861 = vpack.c.b16 %v857, %v856
      %v867 = vsel %vm549, %v826, 0
      %869 = vmatprep.subr.bf16.mxu0 0
      %870 = vmatpush1.bf16.msra.mxu0 %v858
      %871 = vmatprep.subr.bf16.mxu0 0
      %872 = vmatpush1.bf16.msra.mxu0 %v859
      %873 = vmatprep.subr.bf16.mxu0 0
      %874 = vmatpush1.bf16.msra.mxu0 %v860
      %875 = vmatprep.subr.bf16.mxu0 0
      %876 = vmatpush1.bf16.msra.mxu0 %v861
      %877 = vmatprep.subr.bf16.mxu0 0
      %878 = vmatpush1.bf16.msra.mxu0 0
      %879 = vmatprep.subr.bf16.mxu0 0
      %880 = vmatpush1.bf16.msra.mxu0 0
      %881 = vmatprep.subr.bf16.mxu0 0
      %882 = vmatpush1.bf16.msra.mxu0 0
      %883 = vmatprep.subr.bf16.mxu0 0
      %884 = vmatpush1.bf16.msra.mxu0 0
      %885 = vmatprep.subr.bf16.mxu0 0
      %886 = vmatpush1.bf16.msra.mxu0 0
      %887 = vmatprep.subr.bf16.mxu0 0
      %888 = vmatpush1.bf16.msra.mxu0 0
      %889 = vmatprep.subr.bf16.mxu0 0
      %890 = vmatpush1.bf16.msra.mxu0 0
      %891 = vmatprep.subr.bf16.mxu0 0
      %892 = vmatpush1.bf16.msra.mxu0 0
      %893 = vmatprep.subr.bf16.mxu0 0
      %894 = vmatpush1.bf16.msra.mxu0 0
      %895 = vmatprep.subr.bf16.mxu0 0
      %896 = vmatpush1.bf16.msra.mxu0 0
      %897 = vmatprep.subr.bf16.mxu0 0
      %898 = vmatpush1.bf16.msra.mxu0 0
      %899 = vmatprep.subr.bf16.mxu0 0
      %900 = vmatpush1.bf16.msra.mxu0 0
      %901 = vmatprep.mubr.bf16.mxu0 0
      %902 = vmatmul.mubr.bf16.gmra.mrb[0].mxu0 %v867
      %v903 = vpop.f32.mrb[0].mxu0
      %v904 = vadd.f32 %v840, %v903
      %v905 = vpop.f32.mrb[0].mxu0
      %v906 = vpop.f32.mrb[0].mxu0
      %v907 = vadd.f32 %v840, %v906
      %v908 = vpop.f32.mrb[0].mxu0
      %909 = vdwg.mxu0
      %v910 = vadd.f32 %v904, %v437
      %v911 = vadd.f32 %v907, %v438
      %912 = vst.msk [vmem:[%s434] sm:$0xff] %vm544, %v910
      %913 = vst.msk [vmem:[%s434 + $0x8] sm:$0xff] %vm544, %v911
      %s914 = smul.u32 2, %s23
      %p915 = scmp.lt.s32.totalorder %s22, 1
      %s916 = scalar_select %p915, %s22, 1
      %p917 = scmp.lt.s32.totalorder %s914, 7
      %s918 = scalar_select %p917, %s914, 7
      %s919 = smul.addr %s916, 8
      %s920 = sadd.s32 %s918, %s919
      %s921 = smul.addr %s920, 8
      %s922 = scalar_lea.vmem %s7, %s921
      // Predicated region
      $region49: #{tpu_custom_call.1} parent=47 // pred_check
        %p923 = pneg %p234
      $region50: #{tpu_custom_call.1} parent=47 // pred_check_branch
        %925 = sbr.rel (%p923) target = $region52
      $region51: #{tpu_custom_call.1} parent=47 // pred_region
        %s926 = smul.u32 2, %s23
      $region52: #{tpu_custom_call.1} parent=47 // pred_fallthru
        _
    $region48: #{tpu_custom_call.1} parent=5 // pred_fallthru
      _
    %p927 = scmp.le.s32.totalorder 2, %s13
    // Predicated region
    $region53: #{tpu_custom_call.1} parent=5 // pred_check
      %p928 = pneg %p927
    $region54: #{tpu_custom_call.1} parent=5 // pred_check_branch
      %930 = sbr.rel (%p928) target = $region56
    $region55: #{tpu_custom_call.1} parent=5 // pred_region
      %s931 = ssub.s32 %s13, 2
      // Predicated region
      $region57: #{tpu_custom_call.1} parent=55 // pred_check
        %p932 = pneg %p240
      $region58: #{tpu_custom_call.1} parent=55 // pred_check_branch
        %934 = sbr.rel (%p932) target = $region60
      $region59: #{tpu_custom_call.1} parent=55 // pred_region
        %s935 = smul.u32 2, %s25
        %p936 = scmp.lt.s32.totalorder %s24, 1
        %s937 = scalar_select %p936, %s24, 1
        %p938 = scmp.lt.s32.totalorder %s935, 7
        %s939 = scalar_select %p938, %s935, 7
        %s940 = smul.addr %s937, 8
        %s941 = sadd.s32 %s939, %s940
        %s942 = smul.addr %s941, 8
        %s943 = scalar_lea.vmem %s7, %s942
      $region60: #{tpu_custom_call.1} parent=55 // pred_fallthru
        _
    $region56: #{tpu_custom_call.1} parent=5 // pred_fallthru
      _
  $region6: #{tpu_custom_call.1} parent=0 // loop_footer
    %s17 = sadd.s32 1, %s13
  $region7: #{tpu_custom_call.1} parent=0 // loop_footer_branch
    %12 = sbr.rel target = $region3
  $region8: #{tpu_custom_call.1} parent=0 // loop_exit
    _

// kernel: tpu_custom_call.1
$region0: #{tpu_custom_call.1}
  #allocation0 [shape = 'u32[]', space=smem, size = 0x4, offset = 0x4, fixed_abs, tag = 'smem constant byte address 0x4 - core index']
  #allocation1 [shape = 'u32[144,128]{1,0:T(1,128)}', space=vmem, size = 0x12000, scoped, tag = 'internal scratch']
  %s0 = inlined_call_operand.vmem [shape: f32[2,64,32], index: 0, kind: input, shape index: {}]
  %s1 = inlined_call_operand.vmem [shape: f32[2,64,32], index: 1, kind: input, shape index: {}]
  %s2 = inlined_call_operand.vmem [shape: f32[2,64,32], index: 2, kind: input, shape index: {}]
  %s3 = inlined_call_operand.vmem [shape: bf16[288,64], index: 3, kind: input, shape index: {}]
  %s4 = inlined_call_operand.vmem [shape: f32[1,64], index: 4, kind: input, shape index: {}]
  %s5 = inlined_call_operand.vmem [shape: bf16[64,32], index: 5, kind: input, shape index: {}]
  %s6 = inlined_call_operand.vmem [shape: f32[1,32], index: 6, kind: input, shape index: {}]
  %s7 = inlined_call_operand.vmem [shape: f32[2,64,32], index: 7, kind: output, shape index: {}]
  %s8 = sld [smem:[#allocation0]]
  $region61: #{tpu_custom_call.1} parent=0
    _
  %s10 = ssub.s32 1, %s8
  %s11 = scalar_select 0, %s10, %s8
  loop: start=0, step=1, limit=10
  $region2: #{tpu_custom_call.1} parent=0 // loop_pre_header
    _
  $region3: #{tpu_custom_call.1} parent=0 // loop_header
    %s13 = sphi 0, %s17
    %p14 = scmp.ge.s32.totalorder %s13, 10
    %s20 = sphi 0, %s32
    %s21 = sphi 0, %s28
    %s22 = sphi 0, %s20
    %s23 = sphi 0, %s21
    %s24 = sphi 0, %s22
    %s25 = sphi 0, %s23
    %s37 = sphi 0, %s39
    %s40 = sphi 0, %s37
    %s41 = sphi 0, %s40
    %s57 = sphi 0, %s41
    %s73 = sphi 0, %s75
    %s76 = sphi 0, %s73
    %s77 = sphi 0, %s76
    %s93 = sphi 0, %s77
    %s109 = sphi 0, %s111
    %s112 = sphi 0, %s109
    %s113 = sphi 0, %s112
    %s129 = sphi 0, %s113
    %s133 = sphi 0, %s133
    %s135 = sphi 0, %s133
    %s136 = sphi 0, %s135
    %s150 = sphi 0, %s136
    %s154 = sphi 0, %s154
    %s156 = sphi 0, %s154
    %s157 = sphi 0, %s156
    %s171 = sphi 0, %s157
    %s175 = sphi 0, %s175
    %s177 = sphi 0, %s175
    %s178 = sphi 0, %s177
    %s192 = sphi 0, %s178
    %s196 = sphi 0, %s196
    %s198 = sphi 0, %s196
    %s199 = sphi 0, %s198
    %s213 = sphi 0, %s199
    %s221 = sphi 0, %s223
    %s224 = sphi 0, %s221
    %s225 = sphi 0, %s224
    %s241 = sphi 0, %s225
  $region4: #{tpu_custom_call.1} parent=0 // loop_header_branch
    %16 = sbr.rel (%p14) target = $region8
  $region5: #{tpu_custom_call.1} parent=0 // loop_body
    %s18 = ssub.s32 %s13, 1
    %s19 = ssub.s32 %s13, 2
    %s26 = sadd.s32 1, %s21
    %p27 = scmp.ge.s32.totalorder %s26, 4
    %s28 = scalar_select %p27, 0, %s26
    %s29 = sadd.s32 1, %s20
    %s30 = scalar_select %p27, %s29, %s20
    %p31 = scmp.ge.s32.totalorder %s30, 2
    %s32 = scalar_select %p31, 0, %s30
    %s33 = ssub.s32 %s20, %s32
    %s34 = ssub.s32 %s21, %s28
    %s35 = sor.u32 %s33, %s34
    %p36 = scmp.eq.s32.totalorder %s35, 0
    %s38 = sadd.s32 %s37, 1
    %s39 = scalar_select %p36, %s37, %s38
    %p42 = pneg %p36
    %p43 = scmp.eq.s32.totalorder %s13, 7
    %p44 = por %p42, %p43
    %p45 = scmp.ne.s32.totalorder %s37, %s40
    %p46 = scmp.eq.s32.totalorder %s13, 0
    %p47 = por %p45, %p46
    %p48 = scmp.ne.s32.totalorder %s37, %s40
    %p49 = scmp.eq.s32.totalorder %s18, 7
    %p50 = por %p48, %p49
    %p51 = scmp.ne.s32.totalorder %s40, %s41
    %p52 = scmp.eq.s32.totalorder %s18, 0
    %p53 = por %p51, %p52
    %p54 = scmp.ne.s32.totalorder %s40, %s41
    %p55 = scmp.eq.s32.totalorder %s19, 7
    %p56 = por %p54, %p55
    %p58 = scmp.ne.s32.totalorder %s41, %s57
    %p59 = scmp.eq.s32.totalorder %s19, 0
    %p60 = por %p58, %p59
    %s61 = smul.u32 %s21, 2
    %s62 = ssub.s32 %s61, 1
    %p63 = scmp.gt.s32.totalorder %s62, 0
    %s64 = scalar_select %p63, %s62, 0
    %s65 = smul.u32 %s28, 2
    %s66 = ssub.s32 %s65, 1
    %p67 = scmp.gt.s32.totalorder %s66, 0
    %s68 = scalar_select %p67, %s66, 0
    %s69 = ssub.s32 %s20, %s32
    %s70 = ssub.s32 %s64, %s68
    %s71 = sor.u32 %s69, %s70
    %p72 = scmp.eq.s32.totalorder %s71, 0
    %s74 = sadd.s32 %s73, 1
    %s75 = scalar_select %p72, %s73, %s74
    %p78 = pneg %p72
    %p79 = scmp.eq.s32.totalorder %s13, 7
    %p80 = por %p78, %p79
    %p81 = scmp.ne.s32.totalorder %s73, %s76
    %p82 = scmp.eq.s32.totalorder %s13, 0
    %p83 = por %p81, %p82
    %p84 = scmp.ne.s32.totalorder %s73, %s76
    %p85 = scmp.eq.s32.totalorder %s18, 7
    %p86 = por %p84, %p85
    %p87 = scmp.ne.s32.totalorder %s76, %s77
    %p88 = scmp.eq.s32.totalorder %s18, 0
    %p89 = por %p87, %p88
    %p90 = scmp.ne.s32.totalorder %s76, %s77
    %p91 = scmp.eq.s32.totalorder %s19, 7
    %p92 = por %p90, %p91
    %p94 = scmp.ne.s32.totalorder %s77, %s93
    %p95 = scmp.eq.s32.totalorder %s19, 0
    %p96 = por %p94, %p95
    %s97 = sadd.s32 %s21, 1
    %s98 = smul.u32 %s97, 2
    %p99 = scmp.lt.s32.totalorder %s98, 7
    %s100 = scalar_select %p99, %s98, 7
    %s101 = sadd.s32 %s28, 1
    %s102 = smul.u32 %s101, 2
    %p103 = scmp.lt.s32.totalorder %s102, 7
    %s104 = scalar_select %p103, %s102, 7
    %s105 = ssub.s32 %s20, %s32
    %s106 = ssub.s32 %s100, %s104
    %s107 = sor.u32 %s105, %s106
    %p108 = scmp.eq.s32.totalorder %s107, 0
    %s110 = sadd.s32 %s109, 1
    %s111 = scalar_select %p108, %s109, %s110
    %p114 = pneg %p108
    %p115 = scmp.eq.s32.totalorder %s13, 7
    %p116 = por %p114, %p115
    %p117 = scmp.ne.s32.totalorder %s109, %s112
    %p118 = scmp.eq.s32.totalorder %s13, 0
    %p119 = por %p117, %p118
    %p120 = scmp.ne.s32.totalorder %s109, %s112
    %p121 = scmp.eq.s32.totalorder %s18, 7
    %p122 = por %p120, %p121
    %p123 = scmp.ne.s32.totalorder %s112, %s113
    %p124 = scmp.eq.s32.totalorder %s18, 0
    %p125 = por %p123, %p124
    %p126 = scmp.ne.s32.totalorder %s112, %s113
    %p127 = scmp.eq.s32.totalorder %s19, 7
    %p128 = por %p126, %p127
    %p130 = scmp.ne.s32.totalorder %s113, %s129
    %p131 = scmp.eq.s32.totalorder %s19, 0
    %p132 = por %p130, %p131
    %s134 = sadd.s32 %s133, 1
    %p137 = scmp.eq.s32.totalorder %s13, 7
    %p138 = scmp.ne.s32.totalorder %s133, %s135
    %p139 = scmp.eq.s32.totalorder %s13, 0
    %p140 = por %p138, %p139
    %p141 = scmp.ne.s32.totalorder %s133, %s135
    %p142 = scmp.eq.s32.totalorder %s18, 7
    %p143 = por %p141, %p142
    %p144 = scmp.ne.s32.totalorder %s135, %s136
    %p145 = scmp.eq.s32.totalorder %s18, 0
    %p146 = por %p144, %p145
    %p147 = scmp.ne.s32.totalorder %s135, %s136
    %p148 = scmp.eq.s32.totalorder %s19, 7
    %p149 = por %p147, %p148
    %p151 = scmp.ne.s32.totalorder %s136, %s150
    %p152 = scmp.eq.s32.totalorder %s19, 0
    %p153 = por %p151, %p152
    %s155 = sadd.s32 %s154, 1
    %p158 = scmp.eq.s32.totalorder %s13, 7
    %p159 = scmp.ne.s32.totalorder %s154, %s156
    %p160 = scmp.eq.s32.totalorder %s13, 0
    %p161 = por %p159, %p160
    %p162 = scmp.ne.s32.totalorder %s154, %s156
    %p163 = scmp.eq.s32.totalorder %s18, 7
    %p164 = por %p162, %p163
    %p165 = scmp.ne.s32.totalorder %s156, %s157
    %p166 = scmp.eq.s32.totalorder %s18, 0
    %p167 = por %p165, %p166
    %p168 = scmp.ne.s32.totalorder %s156, %s157
    %p169 = scmp.eq.s32.totalorder %s19, 7
    %p170 = por %p168, %p169
    %p172 = scmp.ne.s32.totalorder %s157, %s171
    %p173 = scmp.eq.s32.totalorder %s19, 0
    %p174 = por %p172, %p173
    %s176 = sadd.s32 %s175, 1
    %p179 = scmp.eq.s32.totalorder %s13, 7
    %p180 = scmp.ne.s32.totalorder %s175, %s177
    %p181 = scmp.eq.s32.totalorder %s13, 0
    %p182 = por %p180, %p181
    %p183 = scmp.ne.s32.totalorder %s175, %s177
    %p184 = scmp.eq.s32.totalorder %s18, 7
    %p185 = por %p183, %p184
    %p186 = scmp.ne.s32.totalorder %s177, %s178
    %p187 = scmp.eq.s32.totalorder %s18, 0
    %p188 = por %p186, %p187
    %p189 = scmp.ne.s32.totalorder %s177, %s178
    %p190 = scmp.eq.s32.totalorder %s19, 7
    %p191 = por %p189, %p190
    %p193 = scmp.ne.s32.totalorder %s178, %s192
    %p194 = scmp.eq.s32.totalorder %s19, 0
    %p195 = por %p193, %p194
    %s197 = sadd.s32 %s196, 1
    %p200 = scmp.eq.s32.totalorder %s13, 7
    %p201 = scmp.ne.s32.totalorder %s196, %s198
    %p202 = scmp.eq.s32.totalorder %s13, 0
    %p203 = por %p201, %p202
    %p204 = scmp.ne.s32.totalorder %s196, %s198
    %p205 = scmp.eq.s32.totalorder %s18, 7
    %p206 = por %p204, %p205
    %p207 = scmp.ne.s32.totalorder %s198, %s199
    %p208 = scmp.eq.s32.totalorder %s18, 0
    %p209 = por %p207, %p208
    %p210 = scmp.ne.s32.totalorder %s198, %s199
    %p211 = scmp.eq.s32.totalorder %s19, 7
    %p212 = por %p210, %p211
    %p214 = scmp.ne.s32.totalorder %s199, %s213
    %p215 = scmp.eq.s32.totalorder %s19, 0
    %p216 = por %p214, %p215
    %s217 = ssub.s32 %s20, %s32
    %s218 = ssub.s32 %s21, %s28
    %s219 = sor.u32 %s217, %s218
    %p220 = scmp.eq.s32.totalorder %s219, 0
    %s222 = sadd.s32 %s221, 1
    %s223 = scalar_select %p220, %s221, %s222
    %p226 = pneg %p220
    %p227 = scmp.eq.s32.totalorder %s13, 7
    %p228 = por %p226, %p227
    %p229 = scmp.ne.s32.totalorder %s221, %s224
    %p230 = scmp.eq.s32.totalorder %s13, 0
    %p231 = por %p229, %p230
    %p232 = scmp.ne.s32.totalorder %s221, %s224
    %p233 = scmp.eq.s32.totalorder %s18, 7
    %p234 = por %p232, %p233
    %p235 = scmp.ne.s32.totalorder %s224, %s225
    %p236 = scmp.eq.s32.totalorder %s18, 0
    %p237 = por %p235, %p236
    %p238 = scmp.ne.s32.totalorder %s224, %s225
    %p239 = scmp.eq.s32.totalorder %s19, 7
    %p240 = por %p238, %p239
    %p242 = scmp.ne.s32.totalorder %s225, %s241
    %p243 = scmp.eq.s32.totalorder %s19, 0
    %p244 = por %p242, %p243
    %p245 = scmp.le.s32.totalorder 1, %s13
    %p246 = scmp.lt.s32.totalorder %s13, 9
    %p247 = pnand %p245, %p246
    %p248 = pneg %p247
    // Predicated region
    $region9: #{tpu_custom_call.1} parent=5 // pred_check
      _
    $region10: #{tpu_custom_call.1} parent=5 // pred_check_branch
      %250 = sbr.rel (%p247) target = $region12
    $region11: #{tpu_custom_call.1} parent=5 // pred_region
      %s251 = ssub.s32 %s13, 1
      // Predicated region
      $region13: #{tpu_custom_call.1} parent=11 // pred_check
        %p252 = pneg %p146
      $region14: #{tpu_custom_call.1} parent=11 // pred_check_branch
        %254 = sbr.rel (%p252) target = $region16
      $region15: #{tpu_custom_call.1} parent=11 // pred_region
        _
      $region16: #{tpu_custom_call.1} parent=11 // pred_fallthru
        _
      // Predicated region
      $region17: #{tpu_custom_call.1} parent=11 // pred_check
        %p255 = pneg %p167
      $region18: #{tpu_custom_call.1} parent=11 // pred_check_branch
        %257 = sbr.rel (%p255) target = $region20
      $region19: #{tpu_custom_call.1} parent=11 // pred_region
        _
      $region20: #{tpu_custom_call.1} parent=11 // pred_fallthru
        _
      // Predicated region
      $region21: #{tpu_custom_call.1} parent=11 // pred_check
        %p258 = pneg %p188
      $region22: #{tpu_custom_call.1} parent=11 // pred_check_branch
        %260 = sbr.rel (%p258) target = $region24
      $region23: #{tpu_custom_call.1} parent=11 // pred_region
        _
      $region24: #{tpu_custom_call.1} parent=11 // pred_fallthru
        _
      // Predicated region
      $region25: #{tpu_custom_call.1} parent=11 // pred_check
        %p261 = pneg %p209
      $region26: #{tpu_custom_call.1} parent=11 // pred_check_branch
        %263 = sbr.rel (%p261) target = $region28
      $region27: #{tpu_custom_call.1} parent=11 // pred_region
        _
      $region28: #{tpu_custom_call.1} parent=11 // pred_fallthru
        _
    $region12: #{tpu_custom_call.1} parent=5 // pred_fallthru
      _
    %p264 = scmp.lt.s32.totalorder %s13, 8
    // Predicated region
    $region29: #{tpu_custom_call.1} parent=5 // pred_check
      %p265 = pneg %p264
    $region30: #{tpu_custom_call.1} parent=5 // pred_check_branch
      %267 = sbr.rel (%p265) target = $region32
    $region31: #{tpu_custom_call.1} parent=5 // pred_region
      // Predicated region
      $region33: #{tpu_custom_call.1} parent=31 // pred_check
        %p268 = pneg %p47
      $region34: #{tpu_custom_call.1} parent=31 // pred_check_branch
        %270 = sbr.rel (%p268) target = $region36
      $region35: #{tpu_custom_call.1} parent=31 // pred_region
        %s271 = smul.u32 2, %s21
        %p272 = scmp.lt.s32.totalorder %s20, 1
        %s273 = scalar_select %p272, %s20, 1
        %p274 = scmp.lt.s32.totalorder %s271, 7
        %s275 = scalar_select %p274, %s271, 7
        %s276 = smul.addr %s273, 8
        %s277 = sadd.s32 %s275, %s276
        %s278 = smul.addr %s277, 8
        %s279 = scalar_lea.vmem %s0, %s278
        %s280 = smul.u32 2, %s21
      $region36: #{tpu_custom_call.1} parent=31 // pred_fallthru
        _
      // Predicated region
      $region37: #{tpu_custom_call.1} parent=31 // pred_check
        %p281 = pneg %p83
      $region38: #{tpu_custom_call.1} parent=31 // pred_check_branch
        %283 = sbr.rel (%p281) target = $region40
      $region39: #{tpu_custom_call.1} parent=31 // pred_region
        %s284 = smul.u32 %s21, 2
        %s285 = ssub.s32 %s284, 1
        %p286 = scmp.gt.s32.totalorder %s285, 0
        %s287 = scalar_select %p286, %s285, 0
        %p288 = scmp.lt.s32.totalorder %s20, 1
        %s289 = scalar_select %p288, %s20, 1
        %p290 = scmp.lt.s32.totalorder %s287, 7
        %s291 = scalar_select %p290, %s287, 7
        %s292 = smul.addr %s289, 8
        %s293 = sadd.s32 %s291, %s292
        %s294 = smul.addr %s293, 8
        %s295 = scalar_lea.vmem %s1, %s294
        %s296 = smul.u32 %s21, 2
        %s297 = ssub.s32 %s296, 1
        %p298 = scmp.gt.s32.totalorder %s297, 0
        %s299 = scalar_select %p298, %s297, 0
      $region40: #{tpu_custom_call.1} parent=31 // pred_fallthru
        _
      // Predicated region
      $region41: #{tpu_custom_call.1} parent=31 // pred_check
        %p300 = pneg %p119
      $region42: #{tpu_custom_call.1} parent=31 // pred_check_branch
        %302 = sbr.rel (%p300) target = $region44
      $region43: #{tpu_custom_call.1} parent=31 // pred_region
        %s303 = sadd.s32 %s21, 1
        %s304 = smul.u32 %s303, 2
        %p305 = scmp.lt.s32.totalorder %s304, 7
        %s306 = scalar_select %p305, %s304, 7
        %p307 = scmp.lt.s32.totalorder %s20, 1
        %s308 = scalar_select %p307, %s20, 1
        %p309 = scmp.lt.s32.totalorder %s306, 7
        %s310 = scalar_select %p309, %s306, 7
        %s311 = smul.addr %s308, 8
        %s312 = sadd.s32 %s310, %s311
        %s313 = smul.addr %s312, 8
        %s314 = scalar_lea.vmem %s2, %s313
        %s315 = sadd.s32 %s21, 1
        %s316 = smul.u32 %s315, 2
        %p317 = scmp.lt.s32.totalorder %s316, 7
        %s318 = scalar_select %p317, %s316, 7
      $region44: #{tpu_custom_call.1} parent=31 // pred_fallthru
        _
    $region32: #{tpu_custom_call.1} parent=5 // pred_fallthru
      _
    %p319 = scmp.le.s32.totalorder 1, %s13
    %p320 = scmp.lt.s32.totalorder %s13, 9
    %p321 = pnand %p319, %p320
    %p322 = pneg %p321
    // Predicated region
    $region45: #{tpu_custom_call.1} parent=5 // pred_check
      _
    $region46: #{tpu_custom_call.1} parent=5 // pred_check_branch
      %324 = sbr.rel (%p321) target = $region48
    $region47: #{tpu_custom_call.1} parent=5 // pred_region
      %s325 = ssub.s32 %s13, 1
      %s326 = smul.u32 2, %s23
      %p327 = scmp.lt.s32.totalorder %s22, 1
      %s328 = scalar_select %p327, %s22, 1
      %p329 = scmp.lt.s32.totalorder %s326, 7
      %s330 = scalar_select %p329, %s326, 7
      %s331 = smul.addr %s328, 8
      %s332 = sadd.s32 %s330, %s331
      %s333 = smul.addr %s332, 8
      %s334 = scalar_lea.vmem %s0, %s333
      %p335 = pneg %p53
      %p336 = pneg %p50
      %s337 = smul.u32 %s23, 2
      %s338 = ssub.s32 %s337, 1
      %p339 = scmp.gt.s32.totalorder %s338, 0
      %s340 = scalar_select %p339, %s338, 0
      %p341 = scmp.lt.s32.totalorder %s22, 1
      %s342 = scalar_select %p341, %s22, 1
      %p343 = scmp.lt.s32.totalorder %s340, 7
      %s344 = scalar_select %p343, %s340, 7
      %s345 = smul.addr %s342, 8
      %s346 = sadd.s32 %s344, %s345
      %s347 = smul.addr %s346, 8
      %s348 = scalar_lea.vmem %s1, %s347
      %p349 = pneg %p89
      %p350 = pneg %p86
      %s351 = sadd.s32 %s23, 1
      %s352 = smul.u32 %s351, 2
      %p353 = scmp.lt.s32.totalorder %s352, 7
      %s354 = scalar_select %p353, %s352, 7
      %p355 = scmp.lt.s32.totalorder %s22, 1
      %s356 = scalar_select %p355, %s22, 1
      %p357 = scmp.lt.s32.totalorder %s354, 7
      %s358 = scalar_select %p357, %s354, 7
      %s359 = smul.addr %s356, 8
      %s360 = sadd.s32 %s358, %s359
      %s361 = smul.addr %s360, 8
      %s362 = scalar_lea.vmem %s2, %s361
      %p363 = pneg %p125
      %p364 = pneg %p122
      %p365 = pneg %p146
      %p366 = pneg %p143
      %p367 = pneg %p167
      %p368 = pneg %p164
      %p369 = pneg %p188
      %p370 = pneg %p185
      %p371 = pneg %p209
      %p372 = pneg %p206
      %p373 = pneg %p237
      %p374 = pneg %p234
      %s375 = smul.u32 2, %s23
      %p376 = scmp.lt.s32.totalorder %s22, 1
      %s377 = scalar_select %p376, %s22, 1
      %p378 = scmp.lt.s32.totalorder %s375, 7
      %s379 = scalar_select %p378, %s375, 7
      %s380 = smul.addr %s377, 8
      %s381 = sadd.s32 %s379, %s380
      %s382 = smul.addr %s381, 8
      %s383 = scalar_lea.vmem %s7, %s382
      %s384 = smul.u32 2, %s23
      %p385 = scmp.lt.s32.totalorder %s22, 1
      %s386 = scalar_select %p385, %s22, 1
      %p387 = scmp.lt.s32.totalorder %s384, 7
      %s388 = scalar_select %p387, %s384, 7
      %s389 = smul.addr %s386, 8
      %s390 = sadd.s32 %s388, %s389
      %s391 = smul.addr %s390, 8
      %s392 = scalar_lea.vmem %s0, %s391
      %s393 = smul.u32 2, %s23
      %s394 = smul.u32 %s23, 2
      %s395 = ssub.s32 %s394, 1
      %p396 = scmp.gt.s32.totalorder %s395, 0
      %s397 = scalar_select %p396, %s395, 0
      %p398 = scmp.lt.s32.totalorder %s22, 1
      %s399 = scalar_select %p398, %s22, 1
      %p400 = scmp.lt.s32.totalorder %s397, 7
      %s401 = scalar_select %p400, %s397, 7
      %s402 = smul.addr %s399, 8
      %s403 = sadd.s32 %s401, %s402
      %s404 = smul.addr %s403, 8
      %s405 = scalar_lea.vmem %s1, %s404
      %s406 = smul.u32 %s23, 2
      %s407 = ssub.s32 %s406, 1
      %p408 = scmp.gt.s32.totalorder %s407, 0
      %s409 = scalar_select %p408, %s407, 0
      %s410 = sadd.s32 %s23, 1
      %s411 = smul.u32 %s410, 2
      %p412 = scmp.lt.s32.totalorder %s411, 7
      %s413 = scalar_select %p412, %s411, 7
      %p414 = scmp.lt.s32.totalorder %s22, 1
      %s415 = scalar_select %p414, %s22, 1
      %p416 = scmp.lt.s32.totalorder %s413, 7
      %s417 = scalar_select %p416, %s413, 7
      %s418 = smul.addr %s415, 8
      %s419 = sadd.s32 %s417, %s418
      %s420 = smul.addr %s419, 8
      %s421 = scalar_lea.vmem %s2, %s420
      %s422 = sadd.s32 %s23, 1
      %s423 = smul.u32 %s422, 2
      %p424 = scmp.lt.s32.totalorder %s423, 7
      %s425 = scalar_select %p424, %s423, 7
      %s426 = smul.u32 2, %s23
      %p427 = scmp.lt.s32.totalorder %s22, 1
      %s428 = scalar_select %p427, %s22, 1
      %p429 = scmp.lt.s32.totalorder %s426, 7
      %s430 = scalar_select %p429, %s426, 7
      %s431 = smul.addr %s428, 8
      %s432 = sadd.s32 %s430, %s431
      %s433 = smul.addr %s432, 8
      %s434 = scalar_lea.vmem %s7, %s433
      %s435 = smul.u32 2, %s23
      %v437 = vld [vmem:[%s392] sm:$0xff]
      %v438 = vld [vmem:[%s392 + $0x8] sm:$0xff]
      %v439 = vpack.c.bf16 %v438, %v437
      %p440 = scmp.gt.s32.totalorder %s23, 0
      %v441 = vld [vmem:[%s405] sm:$0xff]
      %s442 = scalar_select %p440, 1, 0
      %v443 = vstv %s442
      %vm444 = vcmp.eq.s32.totalorder %v443, 1
      %v445 = vsel %vm444, %v441, 0.0
      %v446 = vpack.c.bf16 %v445, %v445
      %p447 = scmp.lt.s32.totalorder %s23, 3
      %v448 = vld [vmem:[%s421] sm:$0xff]
      %s449 = scalar_select %p447, 1, 0
      %v450 = vstv %s449
      %vm451 = vcmp.eq.s32.totalorder %v450, 1
      %v452 = vsel %vm451, %v448, 0.0
      %v453 = vpack.c.bf16 %v452, %v452
      %v455 = vrot.slane %v439, 4
      %v457 = vrot.slane %v453, 4
      %vm458 = vcmask 1043456
      %v461 = vsel %vm458, %v446, %v455
      %v463 = vsel %vm458, %v455, %v457
      %vm464 = vsmask.f32 7424
      %v465 = vshrl.u32 %v461, 16
      %v467 = vshll.u32 %v461, 16
      %v469 = vrot.slane %v467, 1
      %v470 = vor.u32 %v465, %v469
      %v471 = vshll.u32 %v463, 16
      %v473 = vrot.slane %v471, 1
      %v474 = vsel %vm464, %v470, %v473
      %v475 = vshrl.u32 %v463, 16
      %v477 = vor.u32 %v475, %v473
      %478 = vrot.lane.b32.xlu0 %v474, 32
      %v479 = vpop.permute.xlu0 %478
      %480 = vrot.lane.b32.xlu0 %v477, 32
      %v481 = vpop.permute.xlu0 %480
      %vm484 = vcmask 1046528
      %v485 = vrot.slane %v461, 1
      %v486 = vrot.slane %v463, 1
      %v487 = vsel %vm484, %v485, %v486
      %488 = vrot.lane.b32.xlu0 %v487, 64
      %v489 = vpop.permute.xlu0 %488
      %490 = vrot.lane.b32.xlu0 %v486, 64
      %v491 = vpop.permute.xlu0 %490
      %vm492 = vsmask.f32 6400
      %v493 = vrot.slane %v465, 1
      %v494 = vrot.slane %v467, 2
      %v495 = vor.u32 %v493, %v494
      %v496 = vrot.slane %v475, 1
      %v497 = vrot.slane %v471, 2
      %v498 = vor.u32 %v496, %v497
      %v499 = vsel %vm492, %v495, %v498
      %500 = vrot.lane.b32.xlu0 %v499, 96
      %v501 = vpop.permute.xlu0 %500
      %502 = vrot.lane.b32.xlu0 %v498, 96
      %v503 = vpop.permute.xlu0 %502
      %vm504 = vcmask 1045504
      %v505 = vrot.slane %v461, 2
      %v506 = vrot.slane %v463, 2
      %v507 = vsel %vm504, %v505, %v506
      %vm508 = vsmask.f32 5376
      %v509 = vrot.slane %v465, 2
      %v510 = vrot.slane %v467, 3
      %v511 = vor.u32 %v509, %v510
      %v512 = vrot.slane %v475, 2
      %v513 = vrot.slane %v471, 3
      %v514 = vor.u32 %v512, %v513
      %v515 = vsel %vm508, %v511, %v514
      %516 = vrot.lane.b32.xlu0 %v515, 32
      %v517 = vpop.permute.xlu0 %516
      %518 = vrot.lane.b32.xlu0 %v514, 32
      %v519 = vpop.permute.xlu0 %518
      %vm520 = vcmask 1044480
      %v521 = vrot.slane %v461, 3
      %v522 = vrot.slane %v463, 3
      %v523 = vsel %vm520, %v521, %v522
      %524 = vrot.lane.b32.xlu0 %v523, 64
      %v525 = vpop.permute.xlu0 %524
      %526 = vrot.lane.b32.xlu0 %v522, 64
      %v527 = vpop.permute.xlu0 %526
      %vm528 = vsmask.f32 4352
      %v529 = vrot.slane %v465, 3
      %v530 = vrot.slane %v467, 4
      %v531 = vor.u32 %v529, %v530
      %v532 = vrot.slane %v475, 3
      %v533 = vrot.slane %v471, 4
      %v534 = vor.u32 %v532, %v533
      %v535 = vsel %vm528, %v531, %v534
      %536 = vrot.lane.b32.xlu0 %v535, 96
      %v537 = vpop.permute.xlu0 %536
      %538 = vrot.lane.b32.xlu0 %v534, 96
      %v539 = vpop.permute.xlu0 %538
      %vm540 = vcmask 1043456
      %v541 = vrot.slane %v461, 4
      %v542 = vrot.slane %v463, 4
      %v543 = vsel %vm540, %v541, %v542
      %vm544 = vcmask 261120
      %v546 = vsel %vm544, %v461, %v479
      %v548 = vsel %vm544, %v463, %v481
      %vm549 = vcmask 523264
      %v551 = vsel %vm549, %v546, %v489
      %v553 = vsel %vm549, %v548, %v491
      %vm554 = vcmask 785408
      %v556 = vsel %vm554, %v551, %v501
      %v558 = vsel %vm554, %v553, %v503
      %v561 = vsel %vm544, %v507, %v517
      %v564 = vsel %vm544, %v506, %v519
      %v566 = vsel %vm549, %v561, %v525
      %v568 = vsel %vm549, %v564, %v527
      %v570 = vsel %vm554, %v566, %v537
      %v572 = vsel %vm554, %v568, %v539
      %v573 = vld [vmem:[%s3] sm:$0xf]
      %v574 = vld [vmem:[%s3 + $0x4] sm:$0xf]
      %v575 = vld [vmem:[%s3 + $0x8] sm:$0xf]
      %v576 = vld [vmem:[%s3 + $0xc] sm:$0xf]
      %v577 = vld [vmem:[%s3 + $0x10] sm:$0xf]
      %v578 = vld [vmem:[%s3 + $0x14] sm:$0xf]
      %v579 = vld [vmem:[%s3 + $0x18] sm:$0xf]
      %v580 = vld [vmem:[%s3 + $0x1c] sm:$0xf]
      %v581 = vld [vmem:[%s3 + $0x20] sm:$0xf]
      %v582 = vld [vmem:[%s3 + $0x24] sm:$0xf]
      %v583 = vld [vmem:[%s3 + $0x28] sm:$0xf]
      %v584 = vld [vmem:[%s3 + $0x2c] sm:$0xf]
      %v585 = vld [vmem:[%s3 + $0x30] sm:$0xf]
      %v586 = vld [vmem:[%s3 + $0x34] sm:$0xf]
      %v587 = vld [vmem:[%s3 + $0x38] sm:$0xf]
      %v588 = vld [vmem:[%s3 + $0x3c] sm:$0xf]
      %v589 = vld [vmem:[%s3 + $0x40] sm:$0xf]
      %v590 = vld [vmem:[%s3 + $0x44] sm:$0xf]
      %v591 = vld [vmem:[%s3 + $0x48] sm:$0xf]
      %v592 = vld [vmem:[%s3 + $0x4c] sm:$0xf]
      %v593 = vld [vmem:[%s3 + $0x50] sm:$0xf]
      %v594 = vld [vmem:[%s3 + $0x54] sm:$0xf]
      %v595 = vld [vmem:[%s3 + $0x58] sm:$0xf]
      %v596 = vld [vmem:[%s3 + $0x5c] sm:$0xf]
      %v597 = vld [vmem:[%s3 + $0x60] sm:$0xf]
      %v598 = vld [vmem:[%s3 + $0x64] sm:$0xf]
      %v599 = vld [vmem:[%s3 + $0x68] sm:$0xf]
      %v600 = vld [vmem:[%s3 + $0x6c] sm:$0xf]
      %v601 = vld [vmem:[%s3 + $0x70] sm:$0xf]
      %v602 = vld [vmem:[%s3 + $0x74] sm:$0xf]
      %v603 = vld [vmem:[%s3 + $0x78] sm:$0xf]
      %v604 = vld [vmem:[%s3 + $0x7c] sm:$0xf]
      %v605 = vld [vmem:[%s3 + $0x80] sm:$0xf]
      %v606 = vld [vmem:[%s3 + $0x84] sm:$0xf]
      %v607 = vld [vmem:[%s3 + $0x88] sm:$0xf]
      %v608 = vld [vmem:[%s3 + $0x8c] sm:$0xf]
      %v609 = vld [vmem:[%s4] sm:$0x1]
      %v611 = vlaneseq
      %v612 = vshrl.u32 %v611, 7
      %v613 = vsub.s32 0, %v612
      %v614 = vrot.slane %v609, %v613
      %v620 = vrot.slane %v556, 2
      %v621 = vrot.slane %v558, 2
      %v622 = vsel %vm504, %v620, %v621
      %v623 = vrot.slane %v570, 2
      %v624 = vrot.slane %v572, 2
      %v625 = vsel %vm504, %v623, %v624
      %v626 = vrot.slane %v543, 2
      %v627 = vrot.slane %v542, 2
      %v628 = vsel %vm504, %v626, %v627
      %v667 = vunpack.c.l.b16 %v573
      %v668 = vunpack.c.l.b16 %v574
      %v669 = vunpack.c.l.b16 %v575
      %v670 = vunpack.c.l.b16 %v576
      %v671 = vunpack.c.l.b16 %v577
      %v672 = vunpack.c.l.b16 %v578
      %v673 = vunpack.c.l.b16 %v579
      %v674 = vunpack.c.l.b16 %v580
      %v675 = vunpack.c.l.b16 %v581
      %v676 = vunpack.c.l.b16 %v582
      %v677 = vunpack.c.l.b16 %v583
      %v678 = vunpack.c.l.b16 %v584
      %v679 = vunpack.c.l.b16 %v585
      %v680 = vunpack.c.l.b16 %v586
      %v681 = vunpack.c.l.b16 %v587
      %v682 = vunpack.c.l.b16 %v588
      %v683 = vunpack.c.l.b16 %v589
      %v684 = vunpack.c.l.b16 %v590
      %v685 = vunpack.c.l.b16 %v591
      %v686 = vunpack.c.l.b16 %v592
      %v687 = vunpack.c.l.b16 %v593
      %v688 = vunpack.c.l.b16 %v594
      %v689 = vunpack.c.l.b16 %v595
      %v690 = vunpack.c.l.b16 %v596
      %v691 = vunpack.c.l.b16 %v597
      %v692 = vunpack.c.l.b16 %v598
      %v693 = vunpack.c.l.b16 %v599
      %v694 = vunpack.c.l.b16 %v600
      %v695 = vunpack.c.l.b16 %v601
      %v696 = vunpack.c.l.b16 %v602
      %v697 = vunpack.c.l.b16 %v603
      %v698 = vunpack.c.l.b16 %v604
      %v699 = vunpack.c.l.b16 %v605
      %v700 = vunpack.c.l.b16 %v606
      %v701 = vunpack.c.l.b16 %v607
      %v702 = vunpack.c.l.b16 %v608
      %v703 = vpack.c.b16 %v668, %v667
      %v704 = vpack.c.b16 %v670, %v669
      %v705 = vpack.c.b16 %v672, %v671
      %v706 = vpack.c.b16 %v674, %v673
      %v707 = vpack.c.b16 %v676, %v675
      %v708 = vpack.c.b16 %v678, %v677
      %v709 = vpack.c.b16 %v680, %v679
      %v710 = vpack.c.b16 %v682, %v681
      %v711 = vpack.c.b16 %v684, %v683
      %v712 = vpack.c.b16 %v686, %v685
      %v713 = vpack.c.b16 %v688, %v687
      %v714 = vpack.c.b16 %v690, %v689
      %v715 = vpack.c.b16 %v692, %v691
      %v716 = vpack.c.b16 %v694, %v693
      %v717 = vpack.c.b16 %v696, %v695
      %v718 = vpack.c.b16 %v698, %v697
      %v719 = vpack.c.b16 %v700, %v699
      %v720 = vpack.c.b16 %v702, %v701
      %v740 = vsel %vm544, %v628, 0
      %742 = vmatprep.subr.bf16.mxu0 0
      %743 = vmatpush1.bf16.msra.mxu0 %v703
      %744 = vmatprep.subr.bf16.mxu0 0
      %745 = vmatpush1.bf16.msra.mxu0 %v704
      %746 = vmatprep.subr.bf16.mxu0 0
      %747 = vmatpush1.bf16.msra.mxu0 %v705
      %748 = vmatprep.subr.bf16.mxu0 0
      %749 = vmatpush1.bf16.msra.mxu0 %v706
      %750 = vmatprep.subr.bf16.mxu0 0
      %751 = vmatpush1.bf16.msra.mxu0 %v707
      %752 = vmatprep.subr.bf16.mxu0 0
      %753 = vmatpush1.bf16.msra.mxu0 %v708
      %754 = vmatprep.subr.bf16.mxu0 0
      %755 = vmatpush1.bf16.msra.mxu0 %v709
      %756 = vmatprep.subr.bf16.mxu0 0
      %757 = vmatpush1.bf16.msra.mxu0 %v710
      %758 = vmatprep.subr.bf16.mxu0 0
      %759 = vmatpush1.bf16.msra.mxu0 %v711
      %760 = vmatprep.subr.bf16.mxu0 0
      %761 = vmatpush1.bf16.msra.mxu0 %v712
      %762 = vmatprep.subr.bf16.mxu0 0
      %763 = vmatpush1.bf16.msra.mxu0 %v713
      %764 = vmatprep.subr.bf16.mxu0 0
      %765 = vmatpush1.bf16.msra.mxu0 %v714
      %766 = vmatprep.subr.bf16.mxu0 0
      %767 = vmatpush1.bf16.msra.mxu0 %v715
      %768 = vmatprep.subr.bf16.mxu0 0
      %769 = vmatpush1.bf16.msra.mxu0 %v716
      %770 = vmatprep.subr.bf16.mxu0 0
      %771 = vmatpush1.bf16.msra.mxu0 %v717
      %772 = vmatprep.subr.bf16.mxu0 0
      %773 = vmatpush1.bf16.msra.mxu0 %v718
      %774 = vmatprep.mubr.bf16.mxu0 %v625
      %775 = vmatmul.mubr.bf16.gmra.mrb[0].mxu0 %v622
      %v776 = vpop.f32.mrb[0].mxu0
      %v777 = vadd.f32 %v614, %v776
      %v778 = vpop.f32.mrb[0].mxu0
      %v779 = vpop.f32.mrb[0].mxu0
      %v780 = vadd.f32 %v614, %v779
      %v781 = vpop.f32.mrb[0].mxu0
      %782 = vdwg.mxu0
      %783 = vmatprep.subr.bf16.mxu0 0
      %784 = vmatpush1.bf16.msra.mxu0 %v719
      %785 = vmatprep.subr.bf16.mxu0 0
      %786 = vmatpush1.bf16.msra.mxu0 %v720
      %787 = vmatprep.subr.bf16.mxu0 0
      %788 = vmatpush1.bf16.msra.mxu0 0
      %789 = vmatprep.subr.bf16.mxu0 0
      %790 = vmatpush1.bf16.msra.mxu0 0
      %791 = vmatprep.subr.bf16.mxu0 0
      %792 = vmatpush1.bf16.msra.mxu0 0
      %793 = vmatprep.subr.bf16.mxu0 0
      %794 = vmatpush1.bf16.msra.mxu0 0
      %795 = vmatprep.subr.bf16.mxu0 0
      %796 = vmatpush1.bf16.msra.mxu0 0
      %797 = vmatprep.subr.bf16.mxu0 0
      %798 = vmatpush1.bf16.msra.mxu0 0
      %799 = vmatprep.subr.bf16.mxu0 0
      %800 = vmatpush1.bf16.msra.mxu0 0
      %801 = vmatprep.subr.bf16.mxu0 0
      %802 = vmatpush1.bf16.msra.mxu0 0
      %803 = vmatprep.subr.bf16.mxu0 0
      %804 = vmatpush1.bf16.msra.mxu0 0
      %805 = vmatprep.subr.bf16.mxu0 0
      %806 = vmatpush1.bf16.msra.mxu0 0
      %807 = vmatprep.subr.bf16.mxu0 0
      %808 = vmatpush1.bf16.msra.mxu0 0
      %809 = vmatprep.subr.bf16.mxu0 0
      %810 = vmatpush1.bf16.msra.mxu0 0
      %811 = vmatprep.subr.bf16.mxu0 0
      %812 = vmatpush1.bf16.msra.mxu0 0
      %813 = vmatprep.subr.bf16.mxu0 0
      %814 = vmatpush1.bf16.msra.mxu0 0
      %815 = vmatprep.mubr.bf16.mxu0 0
      %816 = vmatmul.mubr.bf16.gmra.mrb[0].mxu0 %v740
      %v817 = vpop.f32.mrb[0].mxu0
      %v818 = vadd.f32 %v777, %v817
      %v819 = vpop.f32.mrb[0].mxu0
      %v820 = vpop.f32.mrb[0].mxu0
      %v821 = vadd.f32 %v780, %v820
      %v822 = vpop.f32.mrb[0].mxu0
      %823 = vdwg.mxu0
      %v824 = vmax.f32 %v818, 0.0
      %v825 = vmax.f32 %v821, 0.0
      %v826 = vpack.c.bf16 %v825, %v824
      %v827 = vld [vmem:[%s5] sm:$0xf]
      %v828 = vld [vmem:[%s5 + $0x4] sm:$0xf]
      %v829 = vld [vmem:[%s5 + $0x8] sm:$0xf]
      %v830 = vld [vmem:[%s5 + $0xc] sm:$0xf]
      %v831 = vld [vmem:[%s5 + $0x10] sm:$0xf]
      %v832 = vld [vmem:[%s5 + $0x14] sm:$0xf]
      %v833 = vld [vmem:[%s5 + $0x18] sm:$0xf]
      %v834 = vld [vmem:[%s5 + $0x1c] sm:$0xf]
      %v835 = vld [vmem:[%s6] sm:$0x1]
      %v837 = vlaneseq
      %v838 = vshrl.u32 %v837, 7
      %v839 = vsub.s32 0, %v838
      %v840 = vrot.slane %v835, %v839
      %v850 = vunpack.c.l.b16 %v827
      %v851 = vunpack.c.l.b16 %v828
      %v852 = vunpack.c.l.b16 %v829
      %v853 = vunpack.c.l.b16 %v830
      %v854 = vunpack.c.l.b16 %v831
      %v855 = vunpack.c.l.b16 %v832
      %v856 = vunpack.c.l.b16 %v833
      %v857 = vunpack.c.l.b16 %v834
      %v858 = vpack.c.b16 %v851, %v850
      %v859 = vpack.c.b16 %v853, %v852
      %v860 = vpack.c.b16 %v855, %v854
      %v861 = vpack.c.b16 %v857, %v856
      %v867 = vsel %vm549, %v826, 0
      %869 = vmatprep.subr.bf16.mxu0 0
      %870 = vmatpush1.bf16.msra.mxu0 %v858
      %871 = vmatprep.subr.bf16.mxu0 0
      %872 = vmatpush1.bf16.msra.mxu0 %v859
      %873 = vmatprep.subr.bf16.mxu0 0
      %874 = vmatpush1.bf16.msra.mxu0 %v860
      %875 = vmatprep.subr.bf16.mxu0 0
      %876 = vmatpush1.bf16.msra.mxu0 %v861
      %877 = vmatprep.subr.bf16.mxu0 0
      %878 = vmatpush1.bf16.msra.mxu0 0
      %879 = vmatprep.subr.bf16.mxu0 0
      %880 = vmatpush1.bf16.msra.mxu0 0
      %881 = vmatprep.subr.bf16.mxu0 0
      %882 = vmatpush1.bf16.msra.mxu0 0
      %883 = vmatprep.subr.bf16.mxu0 0
      %884 = vmatpush1.bf16.msra.mxu0 0
      %885 = vmatprep.subr.bf16.mxu0 0
      %886 = vmatpush1.bf16.msra.mxu0 0
      %887 = vmatprep.subr.bf16.mxu0 0
      %888 = vmatpush1.bf16.msra.mxu0 0
      %889 = vmatprep.subr.bf16.mxu0 0
      %890 = vmatpush1.bf16.msra.mxu0 0
      %891 = vmatprep.subr.bf16.mxu0 0
      %892 = vmatpush1.bf16.msra.mxu0 0
      %893 = vmatprep.subr.bf16.mxu0 0
      %894 = vmatpush1.bf16.msra.mxu0 0
      %895 = vmatprep.subr.bf16.mxu0 0
      %896 = vmatpush1.bf16.msra.mxu0 0
      %897 = vmatprep.subr.bf16.mxu0 0
      %898 = vmatpush1.bf16.msra.mxu0 0
      %899 = vmatprep.subr.bf16.mxu0 0
      %900 = vmatpush1.bf16.msra.mxu0 0
      %901 = vmatprep.mubr.bf16.mxu0 0
      %902 = vmatmul.mubr.bf16.gmra.mrb[0].mxu0 %v867
      %v903 = vpop.f32.mrb[0].mxu0
      %v904 = vadd.f32 %v840, %v903
      %v905 = vpop.f32.mrb[0].mxu0
      %v906 = vpop.f32.mrb[0].mxu0
      %v907 = vadd.f32 %v840, %v906
      %v908 = vpop.f32.mrb[0].mxu0
      %909 = vdwg.mxu0
      %v910 = vadd.f32 %v904, %v437
      %v911 = vadd.f32 %v907, %v438
      %912 = vst.msk [vmem:[%s434] sm:$0xff] %vm544, %v910
      %913 = vst.msk [vmem:[%s434 + $0x8] sm:$0xff] %vm544, %v911
      %s914 = smul.u32 2, %s23
      %p915 = scmp.lt.s32.totalorder %s22, 1
      %s916 = scalar_select %p915, %s22, 1
      %p917 = scmp.lt.s32.totalorder %s914, 7
      %s918 = scalar_select %p917, %s914, 7
      %s919 = smul.addr %s916, 8
      %s920 = sadd.s32 %s918, %s919
      %s921 = smul.addr %s920, 8
      %s922 = scalar_lea.vmem %s7, %s921
      // Predicated region
      $region49: #{tpu_custom_call.1} parent=47 // pred_check
        %p923 = pneg %p234
      $region50: #{tpu_custom_call.1} parent=47 // pred_check_branch
        %925 = sbr.rel (%p923) target = $region52
      $region51: #{tpu_custom_call.1} parent=47 // pred_region
        %s926 = smul.u32 2, %s23
      $region52: #{tpu_custom_call.1} parent=47 // pred_fallthru
        _
    $region48: #{tpu_custom_call.1} parent=5 // pred_fallthru
      _
    %p927 = scmp.le.s32.totalorder 2, %s13
    // Predicated region
    $region53: #{tpu_custom_call.1} parent=5 // pred_check
      %p928 = pneg %p927
    $region54: #{tpu_custom_call.1} parent=5 // pred_check_branch
      %930 = sbr.rel (%p928) target = $region56
    $region55: #{tpu_custom_call.1} parent=5 // pred_region
      %s931 = ssub.s32 %s13, 2
      // Predicated region
      $region57: #{tpu_custom_call.1} parent=55 // pred_check
        %p932 = pneg %p240
      $region58: #{tpu_custom_call.1} parent=55 // pred_check_branch
        %934 = sbr.rel (%p932) target = $region60
      $region59: #{tpu_custom_call.1} parent=55 // pred_region
        %s935 = smul.u32 2, %s25
        %p936 = scmp.lt.s32.totalorder %s24, 1
        %s937 = scalar_select %p936, %s24, 1
        %p938 = scmp.lt.s32.totalorder %s935, 7
        %s939 = scalar_select %p938, %s935, 7
        %s940 = smul.addr %s937, 8
        %s941 = sadd.s32 %s939, %s940
        %s942 = smul.addr %s941, 8
        %s943 = scalar_lea.vmem %s7, %s942
      $region60: #{tpu_custom_call.1} parent=55 // pred_fallthru
        _
    $region56: #{tpu_custom_call.1} parent=5 // pred_fallthru
      _
  $region6: #{tpu_custom_call.1} parent=0 // loop_footer
    %s17 = sadd.s32 1, %s13
  $region7: #{tpu_custom_call.1} parent=0 // loop_footer_branch
    %12 = sbr.rel target = $region3
  $region8: #{tpu_custom_call.1} parent=0 // loop_exit
    _

</llo_original>
